<compile_context>
chip_gen: v6e
topology: v6e:2x2x1
jax: 0.10.0
libtpu: 0.0.40
codegen_flags: <defaults>
</compile_context>

<pallas_src>
import functools
import math

import numpy as np
import jax
import jax.numpy as jnp
from jax import lax
from jax.experimental import pallas as pl
from jax.experimental.pallas import tpu as pltpu


# MXU operand dtype.  bf16 halves MXU passes on v5e/v6e/v7x; accumulation
# (preferred_element_type) and every elementwise / softmax / LayerNorm op stay
# in f32.  Set to jnp.float32 for bit-exact f32 parity with the PyTorch model.
MXU_DTYPE = jnp.bfloat16


def _mm(a, b):
    """a @ b on the MXU with f32 accumulation."""
    return jnp.dot(a.astype(MXU_DTYPE), b.astype(MXU_DTYPE),
                   preferred_element_type=jnp.float32)


def _mm_t(a, b):
    """a @ b.T without materializing the transpose (contract last vs last)."""
    return lax.dot_general(a.astype(MXU_DTYPE), b.astype(MXU_DTYPE),
                           dimension_numbers=(((1,), (1,)), ((), ())),
                           preferred_element_type=jnp.float32)


def _round_up(n, m):
    return -(-n // m) * m


# ------------------------------ fused kernel -------------------------------

def _fused_forward_kernel(x_ref, a_ref, b_ref, o_ref, *,
                          B, S, C, D, H, dk, dv, F,
                          out_rows, nc_pad, offA, offB, act, eps):
    """Whole Cross_TS forward (time path) in one invocation.

    x_ref : (B*S, C)  input values; one zero row per batch at the cls slot
    a_ref : packed slab A — every parameter with D columns, row-stacked
    b_ref : packed slab B — (D+1)-row [weight ; bias] column blocks
    o_ref : (out_rows, nc_pad) lane-dense logits (rows>=B / cols>=NC are pad)
    """
    Dk, Dv = H * dk, H * dv

    # ---- unpack parameter slabs (static slices) -----------------------------
    emb_w = a_ref[offA["emb_w"]:offA["emb_w"] + C, :]          # (C, D)
    pe = a_ref[offA["pe"]:offA["pe"] + S, :]                    # (S, D); row S-1 = cls token
    wo = a_ref[offA["wo"]:offA["wo"] + Dv, :]                   # (Dv, D)
    ff_w2 = a_ref[offA["ff_w2"]:offA["ff_w2"] + F, :]           # (F, D)
    v0 = offA["vecs"]
    bo = a_ref[v0 + 0:v0 + 1, :]
    ln1_g = a_ref[v0 + 1:v0 + 2, :]
    ln1_b = a_ref[v0 + 2:v0 + 3, :]
    ff_b2 = a_ref[v0 + 3:v0 + 4, :]
    ln2_g = a_ref[v0 + 4:v0 + 5, :]
    ln2_b = a_ref[v0 + 5:v0 + 6, :]

    c0 = offB["wqkv"]
    wqkv = b_ref[0:D, c0:c0 + 2 * Dk + Dv]                      # (D, 2*Dk+Dv)
    bqkv = b_ref[D:D + 1, c0:c0 + 2 * Dk + Dv]
    c1 = offB["ff_w1"]
    ff_w1 = b_ref[0:D, c1:c1 + F]                               # (D, F)
    ff_b1 = b_ref[D:D + 1, c1:c1 + F]
    c2 = offB["cls_w"]
    cls_w = b_ref[0:D, c2:c2 + nc_pad]                          # (D, nc_pad) lane-dense
    cls_b = b_ref[D:D + 1, c2:c2 + nc_pad]

    def layer_norm(x, g, b):
        mean = jnp.mean(x, axis=-1, keepdims=True)
        var = jnp.mean((x - mean) ** 2, axis=-1, keepdims=True)
        return (x - mean) * lax.rsqrt(var + eps) * g + b

    # ---- TimeEmbedder on the batch-stacked slab: one matmul + one add -------
    # emb_b is folded into pe rows 0..L-1; the cls token sits in pe row S-1
    # (x has a zero row there), so no in-kernel concatenation is needed.
    emb = _mm(x_ref[...], emb_w)                                 # (B*S, D)
    xs = emb + jnp.concatenate([pe] * B, axis=0)                 # token stream

    # ---- fused QKV projection over the whole slab (one MXU call) ------------
    # 1/sqrt(dk) is already folded into the Q weights and Q bias.
    qkv = _mm(xs, wqkv) + bqkv                                   # (B*S, 2*Dk+Dv)

    # additive causal mask, built once and reused by every (b, h) score
    # TODO(synk): with the cls token appended at position S-1, ordinary tokens
    # cannot attend to it under the causal mask (same as the original port).
    r = lax.broadcasted_iota(jnp.int32, (S, S), 0)
    c = lax.broadcasted_iota(jnp.int32, (S, S), 1)
    mask_bias = jnp.where(c <= r, jnp.float32(0.0), jnp.float32(-1e9))

    # ---- attention, phase-split so the 2*B*H tiny matmuls can pipeline ------
    q_l, k_l, v_l = [], [], []
    for b in range(B):                                           # static unroll
        r0 = b * S
        for h in range(H):
            q_l.append(qkv[r0:r0 + S, h * dk:(h + 1) * dk])
            k_l.append(qkv[r0:r0 + S, Dk + h * dk:Dk + (h + 1) * dk])
            v_l.append(qkv[r0:r0 + S, 2 * Dk + h * dv:2 * Dk + (h + 1) * dv])

    # phase 1: all B*H score matmuls (q @ k^T, no explicit transpose)
    scores = [_mm_t(q, k) + mask_bias for q, k in zip(q_l, k_l)]
    # phase 2: all softmaxes (exact reciprocal for parity with the reference)
    probs = []
    for s in scores:
        p = jnp.exp(s - jnp.max(s, axis=-1, keepdims=True))
        probs.append(p * pl.reciprocal(jnp.sum(p, axis=-1, keepdims=True)))
    # phase 3: all PV matmuls, then assemble one lane-dense (B*S, Dv) block
    ctx = [_mm(p, v) for p, v in zip(probs, v_l)]
    attn = jnp.concatenate(
        [jnp.concatenate(ctx[b * H:(b + 1) * H], axis=-1) for b in range(B)],
        axis=0)                                                  # (B*S, Dv)

    # ---- output projection + residual + LN1 (whole slab at once) ------------
    x1 = layer_norm(xs + _mm(attn, wo) + bo, ln1_g, ln1_b)

    # ---- feed-forward (1x1 convs == matmuls) + residual + LN2 ---------------
    y = _mm(x1, ff_w1) + ff_b1
    if act == "gelu":
        y = jax.nn.gelu(y)
    elif act == "relu":
        y = jnp.maximum(y, 0.0)
    x2 = layer_norm(x1 + _mm(y, ff_w2) + ff_b2, ln2_g, ln2_b)

    # ---- classifier head: gather cls rows, one matmul, one dense store ------
    rows = [x2[b * S + S - 1:b * S + S, :] for b in range(B)]
    if out_rows > B:
        rows.append(jnp.zeros((out_rows - B, D), jnp.float32))
    cls_rows = jnp.concatenate(rows, axis=0)                     # (out_rows, D)
    logits = _mm(cls_rows, cls_w) + cls_b                        # (out_rows, nc_pad)
    o_ref[...] = logits.astype(o_ref.dtype)


# --------------------------- model configuration ---------------------------

class Args:
    model_type = "time"
    token_d_model = 32
    n_heads = 4
    d_keys = 8
    d_values = 8
    feedforward_dim = 64
    feedforward_activation = "gelu"
    num_classes = 5
    single_depth = 1
    distil = False
    causal_kernel_size = 1      # 1x1 -> pointwise projection
    value_kernel_size = 1
    forward_kernel_size = 1
    input_channels = 4
    seq_len = 16


def sinusoidal_embedding(length, dim):
    # Mirrors TSCtransformer.sinusoidal_embedding
    p = np.arange(length, dtype=np.float64)[:, None]
    i = np.arange(dim, dtype=np.float64)[None, :]
    pe = p / (10000.0 ** (2.0 * (i // 2) / dim))
    pe[:, 0::2] = np.sin(pe[:, 0::2])
    pe[:, 1::2] = np.cos(pe[:, 1::2])
    return jnp.asarray(pe, dtype=jnp.float32)   # (length, dim)


def init_params(args, key):
    D = args.token_d_model
    H, dk, dv = args.n_heads, args.d_keys, args.d_values
    F = args.feedforward_dim
    C = args.input_channels
    L = args.seq_len

    ks = jax.random.split(key, 10)
    std = 0.02

    def w(k, shape):
        return jax.random.normal(k, shape, jnp.float32) * std

    return {
        "pe": sinusoidal_embedding(L, D),                       # (L, D)
        "emb_w": w(ks[0], (C, D)), "emb_b": jnp.zeros((D,), jnp.float32),
        "cls_token": w(ks[1], (1, D)),
        "wq": w(ks[2], (D, H * dk)), "bq": jnp.zeros((H * dk,), jnp.float32),
        "wk": w(ks[3], (D, H * dk)), "bk": jnp.zeros((H * dk,), jnp.float32),
        "wv": w(ks[4], (D, H * dv)), "bv": jnp.zeros((H * dv,), jnp.float32),
        "wo": w(ks[5], (H * dv, D)), "bo": jnp.zeros((D,), jnp.float32),
        "ln1_g": jnp.ones((D,), jnp.float32), "ln1_b": jnp.zeros((D,), jnp.float32),
        "ff_w1": w(ks[6], (D, F)), "ff_b1": jnp.zeros((F,), jnp.float32),
        "ff_w2": w(ks[7], (F, D)), "ff_b2": jnp.zeros((D,), jnp.float32),
        "ln2_g": jnp.ones((D,), jnp.float32), "ln2_b": jnp.zeros((D,), jnp.float32),
        "cls_w": w(ks[8], (D, args.num_classes)),
        "cls_b": jnp.zeros((args.num_classes,), jnp.float32),
    }


def pack_params(params, args):
    """Fold constants and pack the ~19 small parameters into two VMEM slabs.

    slab A: every array with D columns, row-stacked on 8-row boundaries.
    slab B: (D+1)-row [weight ; bias] column blocks on 128-lane boundaries
            (classifier block padded to the lane-dense output width).
    Returns (packed_arrays, static_meta).
    """
    F = args.feedforward_dim
    NC = args.num_classes
    dk = args.d_keys

    # fold 1/sqrt(dk) into the Q projection (weights AND bias)
    scale = 1.0 / math.sqrt(dk)
    wqkv = jnp.concatenate(
        [params["wq"] * scale, params["wk"], params["wv"]], axis=1)
    bqkv = jnp.concatenate(
        [params["bq"] * scale, params["bk"], params["bv"]], axis=0)

    # PE slab: rows 0..L-1 = sinusoidal PE + embedding bias, row L = cls token.
    pe_ext = jnp.concatenate(
        [params["pe"] + params["emb_b"][None, :], params["cls_token"]], axis=0)

    # ---- slab A --------------------------------------------------------------
    vecs = jnp.stack([params["bo"], params["ln1_g"], params["ln1_b"],
                      params["ff_b2"], params["ln2_g"], params["ln2_b"]], axis=0)
    sections = [("emb_w", params["emb_w"]), ("pe", pe_ext),
                ("wo", params["wo"]), ("ff_w2", params["ff_w2"]),
                ("vecs", vecs)]
    off_a, rows, cur = {}, [], 0
    for name, arr in sections:
        off_a[name] = cur
        padded = _round_up(arr.shape[0], 8)
        rows.append(jnp.pad(arr, ((0, padded - arr.shape[0]), (0, 0))))
        cur += padded
    slab_a = jnp.concatenate(rows, axis=0)                      # (136, D) here

    # ---- slab B --------------------------------------------------------------
    nc_pad = _round_up(NC, 128)
    blocks = [("wqkv", wqkv, bqkv, _round_up(wqkv.shape[1], 128)),
              ("ff_w1", params["ff_w1"], params["ff_b1"], _round_up(F, 128)),
              ("cls_w", params["cls_w"], params["cls_b"], nc_pad)]
    off_b, cols, cur = {}, [], 0
    for name, w_, b_, width in blocks:
        off_b[name] = cur
        wb = jnp.concatenate([w_, b_[None, :]], axis=0)         # (D+1, n)
        cols.append(jnp.pad(wb, ((0, 0), (0, width - wb.shape[1]))))
        cur += width
    slab_b = jnp.concatenate(cols, axis=1)                      # (D+1, 384) here

    packed = {"slab_a": slab_a, "slab_b": slab_b}
    meta = {"off_a": off_a, "off_b": off_b, "nc_pad": nc_pad}
    return packed, meta


# ------------------------------ forward pass -------------------------------

def cross_ts_forward(packed, x, args, meta):
    """Cross_TS.forward with model_type='time'.  x: (B, L, C) channels-last."""
    B, L, C = x.shape
    S = L + 1
    D = args.token_d_model
    H, dk, dv = args.n_heads, args.d_keys, args.d_values
    F = args.feedforward_dim
    NC = args.num_classes
    nc_pad = meta["nc_pad"]
    out_rows = _round_up(B, 8)

    # append one zero row per batch (the cls slot) -> contiguous (B*S, C) slab
    x_pad = jnp.concatenate(
        [x.astype(jnp.float32), jnp.zeros((B, 1, C), jnp.float32)],
        axis=1).reshape(B * S, C)

    kernel = functools.partial(
        _fused_forward_kernel,
        B=B, S=S, C=C, D=D, H=H, dk=dk, dv=dv, F=F,
        out_rows=out_rows, nc_pad=nc_pad,
        offA=meta["off_a"], offB=meta["off_b"],
        act=args.feedforward_activation, eps=1e-5)

    inputs = (x_pad, packed["slab_a"], packed["slab_b"])

    # One fused pallas_call: 3 input DMAs (x + 2 parameter slabs), 1 lane-dense
    # output store.  Whole working set is a few tens of KB -> no tiling needed
    # on any generation (v5e/v6e/v7x).
    # TODO(synk): for large batches, make B a leading "parallel" grid axis so
    # v7x's two TensorCores split it; at B=2 the per-step overhead dominates.
    out = pl.pallas_call(
        kernel,
        out_shape=jax.ShapeDtypeStruct((out_rows, nc_pad), jnp.float32),
        grid=(1,),
        in_specs=[pl.BlockSpec(a.shape, lambda i: (0, 0)) for a in inputs],
        out_specs=pl.BlockSpec((out_rows, nc_pad), lambda i: (0, 0)),
        compiler_params=pltpu.CompilerParams(
            dimension_semantics=("arbitrary",)),
    )(*inputs)

    logits = out[:B, :NC].astype(x.dtype)
    attns = None                    # output_attention=False; dropout = eval mode
    return logits, attns


# ---------------------------------- main -----------------------------------

if __name__ == "__main__":
    args = Args()
    key = jax.random.PRNGKey(0)
    k_param, k_input = jax.random.split(key)

    params = init_params(args, k_param)
    packed, meta = pack_params(params, args)        # one-time parameter packing

    x = jax.random.normal(
        k_input, (2, args.seq_len, args.input_channels), jnp.float32)

    fwd = jax.jit(functools.partial(cross_ts_forward, args=args, meta=meta))
    logits, attns = fwd(packed, x)
    logits = jax.block_until_ready(logits)

    assert logits.shape == (2, args.num_classes)
    assert bool(jnp.all(jnp.isfinite(logits)))
    print("KERNEL_OK")
</pallas_src>

<mosaic_0001>
module attributes {stable_mosaic.version = 11 : i64} {
  func.func @_fused_forward_kernel(%arg0: i32, %arg1: memref<34x4xf32, #tpu.memory_space<vmem>>, %arg2: memref<136x32xf32, #tpu.memory_space<vmem>>, %arg3: memref<33x384xf32, #tpu.memory_space<vmem>>, %arg4: memref<8x128xf32, #tpu.memory_space<vmem>>) attributes {dimension_semantics = [#tpu.dimension_semantics<arbitrary>], iteration_bounds = array<i64: 1>, scalar_prefetch = 0 : i64, scratch_operands = 0 : i64, tpu.core_type = #tpu.core_type<tc>, window_params = [{pipeline_mode = #tpu.pipeline_mode<synchronous>, transform_indices = @transform_0, window_bounds = array<i64: 34, 4>}, {pipeline_mode = #tpu.pipeline_mode<synchronous>, transform_indices = @transform_1, window_bounds = array<i64: 136, 32>}, {pipeline_mode = #tpu.pipeline_mode<synchronous>, transform_indices = @transform_2, window_bounds = array<i64: 33, 384>}, {pipeline_mode = #tpu.pipeline_mode<synchronous>, transform_indices = @transform_3, window_bounds = array<i64: 8, 128>}]} {
    %c0 = arith.constant 0 : index
    %c0_0 = arith.constant 0 : index
    %0 = vector.load %arg2[%c0, %c0_0] : memref<136x32xf32, #tpu.memory_space<vmem>>, vector<4x32xf32>
    %c8 = arith.constant 8 : index
    %c0_1 = arith.constant 0 : index
    %1 = vector.load %arg2[%c8, %c0_1] : memref<136x32xf32, #tpu.memory_space<vmem>>, vector<17x32xf32>
    %c32 = arith.constant 32 : index
    %c0_2 = arith.constant 0 : index
    %2 = vector.load %arg2[%c32, %c0_2] : memref<136x32xf32, #tpu.memory_space<vmem>>, vector<32x32xf32>
    %c64 = arith.constant 64 : index
    %c0_3 = arith.constant 0 : index
    %3 = vector.load %arg2[%c64, %c0_3] : memref<136x32xf32, #tpu.memory_space<vmem>>, vector<64x32xf32>
    %c128 = arith.constant 128 : index
    %c0_4 = arith.constant 0 : index
    %4 = vector.load %arg2[%c128, %c0_4] : memref<136x32xf32, #tpu.memory_space<vmem>>, vector<1x32xf32>
    %c129 = arith.constant 129 : index
    %c0_5 = arith.constant 0 : index
    %5 = vector.load %arg2[%c129, %c0_5] : memref<136x32xf32, #tpu.memory_space<vmem>>, vector<1x32xf32>
    %c130 = arith.constant 130 : index
    %c0_6 = arith.constant 0 : index
    %6 = vector.load %arg2[%c130, %c0_6] : memref<136x32xf32, #tpu.memory_space<vmem>>, vector<1x32xf32>
    %c131 = arith.constant 131 : index
    %c0_7 = arith.constant 0 : index
    %7 = vector.load %arg2[%c131, %c0_7] : memref<136x32xf32, #tpu.memory_space<vmem>>, vector<1x32xf32>
    %c132 = arith.constant 132 : index
    %c0_8 = arith.constant 0 : index
    %8 = vector.load %arg2[%c132, %c0_8] : memref<136x32xf32, #tpu.memory_space<vmem>>, vector<1x32xf32>
    %c133 = arith.constant 133 : index
    %c0_9 = arith.constant 0 : index
    %9 = vector.load %arg2[%c133, %c0_9] : memref<136x32xf32, #tpu.memory_space<vmem>>, vector<1x32xf32>
    %c0_10 = arith.constant 0 : index
    %c0_11 = arith.constant 0 : index
    %10 = vector.load %arg3[%c0_10, %c0_11] : memref<33x384xf32, #tpu.memory_space<vmem>>, vector<32x96xf32>
    %c32_12 = arith.constant 32 : index
    %c0_13 = arith.constant 0 : index
    %11 = vector.load %arg3[%c32_12, %c0_13] : memref<33x384xf32, #tpu.memory_space<vmem>>, vector<1x96xf32>
    %c0_14 = arith.constant 0 : index
    %c128_15 = arith.constant 128 : index
    %12 = vector.load %arg3[%c0_14, %c128_15] : memref<33x384xf32, #tpu.memory_space<vmem>>, vector<32x64xf32>
    %c32_16 = arith.constant 32 : index
    %c128_17 = arith.constant 128 : index
    %13 = vector.load %arg3[%c32_16, %c128_17] : memref<33x384xf32, #tpu.memory_space<vmem>>, vector<1x64xf32>
    %c0_18 = arith.constant 0 : index
    %c256 = arith.constant 256 : index
    %14 = vector.load %arg3[%c0_18, %c256] : memref<33x384xf32, #tpu.memory_space<vmem>>, vector<32x128xf32>
    %c32_19 = arith.constant 32 : index
    %c256_20 = arith.constant 256 : index
    %15 = vector.load %arg3[%c32_19, %c256_20] : memref<33x384xf32, #tpu.memory_space<vmem>>, vector<1x128xf32>
    %c0_21 = arith.constant 0 : index
    %c0_22 = arith.constant 0 : index
    %16 = vector.load %arg1[%c0_21, %c0_22] : memref<34x4xf32, #tpu.memory_space<vmem>>, vector<34x4xf32>
    %17 = arith.truncf %16 : vector<34x4xf32> to vector<34x4xbf16>
    %18 = arith.truncf %0 : vector<4x32xf32> to vector<4x32xbf16>
    %cst = arith.constant dense<0.000000e+00> : vector<34x32xf32>
    %19 = tpu.matmul %17, %18, %cst {dimension_numbers = #tpu.dot_dimension_numbers<[1], [0], [0], [1], [0, 0, 1, 1], [], []>} : vector<34x4xbf16>, vector<4x32xbf16>, vector<34x32xf32> -> vector<34x32xf32>
    %20 = tpu.concatenate %1, %1 in 0 : vector<17x32xf32>, vector<17x32xf32> -> vector<34x32xf32>
    %21 = arith.addf %19, %20 : vector<34x32xf32>
    %22 = arith.truncf %21 : vector<34x32xf32> to vector<34x32xbf16>
    %23 = arith.truncf %10 : vector<32x96xf32> to vector<32x96xbf16>
    %cst_23 = arith.constant dense<0.000000e+00> : vector<34x96xf32>
    %24 = tpu.matmul %22, %23, %cst_23 {dimension_numbers = #tpu.dot_dimension_numbers<[1], [0], [0], [1], [0, 0, 1, 1], [], []>} : vector<34x32xbf16>, vector<32x96xbf16>, vector<34x96xf32> -> vector<34x96xf32>
    %25 = vector.broadcast %11 : vector<1x96xf32> to vector<34x96xf32>
    %26 = arith.addf %24, %25 : vector<34x96xf32>
    %27 = tpu.iota {dimensions = array<i32: 0>} : vector<17x17xi32>
    %28 = tpu.iota {dimensions = array<i32: 1>} : vector<17x17xi32>
    %29 = arith.cmpi sle, %28, %27 : vector<17x17xi32>
    %cst_24 = arith.constant 0.000000e+00 : f32
    %cst_25 = arith.constant -1.000000e+09 : f32
    %30 = vector.broadcast %cst_24 : f32 to vector<17x17xf32>
    %31 = vector.broadcast %cst_25 : f32 to vector<17x17xf32>
    %32 = arith.select %29, %30, %31 : vector<17x17xi1>, vector<17x17xf32>
    %33 = vector.extract_strided_slice %26 {offsets = [0, 0], sizes = [17, 8], strides = [1, 1]} : vector<34x96xf32> to vector<17x8xf32>
    %34 = vector.extract_strided_slice %26 {offsets = [0, 32], sizes = [17, 8], strides = [1, 1]} : vector<34x96xf32> to vector<17x8xf32>
    %35 = vector.extract_strided_slice %26 {offsets = [0, 64], sizes = [17, 8], strides = [1, 1]} : vector<34x96xf32> to vector<17x8xf32>
    %36 = vector.extract_strided_slice %26 {offsets = [0, 8], sizes = [17, 8], strides = [1, 1]} : vector<34x96xf32> to vector<17x8xf32>
    %37 = vector.extract_strided_slice %26 {offsets = [0, 40], sizes = [17, 8], strides = [1, 1]} : vector<34x96xf32> to vector<17x8xf32>
    %38 = vector.extract_strided_slice %26 {offsets = [0, 72], sizes = [17, 8], strides = [1, 1]} : vector<34x96xf32> to vector<17x8xf32>
    %39 = vector.extract_strided_slice %26 {offsets = [0, 16], sizes = [17, 8], strides = [1, 1]} : vector<34x96xf32> to vector<17x8xf32>
    %40 = vector.extract_strided_slice %26 {offsets = [0, 48], sizes = [17, 8], strides = [1, 1]} : vector<34x96xf32> to vector<17x8xf32>
    %41 = vector.extract_strided_slice %26 {offsets = [0, 80], sizes = [17, 8], strides = [1, 1]} : vector<34x96xf32> to vector<17x8xf32>
    %42 = vector.extract_strided_slice %26 {offsets = [0, 24], sizes = [17, 8], strides = [1, 1]} : vector<34x96xf32> to vector<17x8xf32>
    %43 = vector.extract_strided_slice %26 {offsets = [0, 56], sizes = [17, 8], strides = [1, 1]} : vector<34x96xf32> to vector<17x8xf32>
    %44 = vector.extract_strided_slice %26 {offsets = [0, 88], sizes = [17, 8], strides = [1, 1]} : vector<34x96xf32> to vector<17x8xf32>
    %45 = vector.extract_strided_slice %26 {offsets = [17, 0], sizes = [17, 8], strides = [1, 1]} : vector<34x96xf32> to vector<17x8xf32>
    %46 = vector.extract_strided_slice %26 {offsets = [17, 32], sizes = [17, 8], strides = [1, 1]} : vector<34x96xf32> to vector<17x8xf32>
    %47 = vector.extract_strided_slice %26 {offsets = [17, 64], sizes = [17, 8], strides = [1, 1]} : vector<34x96xf32> to vector<17x8xf32>
    %48 = vector.extract_strided_slice %26 {offsets = [17, 8], sizes = [17, 8], strides = [1, 1]} : vector<34x96xf32> to vector<17x8xf32>
    %49 = vector.extract_strided_slice %26 {offsets = [17, 40], sizes = [17, 8], strides = [1, 1]} : vector<34x96xf32> to vector<17x8xf32>
    %50 = vector.extract_strided_slice %26 {offsets = [17, 72], sizes = [17, 8], strides = [1, 1]} : vector<34x96xf32> to vector<17x8xf32>
    %51 = vector.extract_strided_slice %26 {offsets = [17, 16], sizes = [17, 8], strides = [1, 1]} : vector<34x96xf32> to vector<17x8xf32>
    %52 = vector.extract_strided_slice %26 {offsets = [17, 48], sizes = [17, 8], strides = [1, 1]} : vector<34x96xf32> to vector<17x8xf32>
    %53 = vector.extract_strided_slice %26 {offsets = [17, 80], sizes = [17, 8], strides = [1, 1]} : vector<34x96xf32> to vector<17x8xf32>
    %54 = vector.extract_strided_slice %26 {offsets = [17, 24], sizes = [17, 8], strides = [1, 1]} : vector<34x96xf32> to vector<17x8xf32>
    %55 = vector.extract_strided_slice %26 {offsets = [17, 56], sizes = [17, 8], strides = [1, 1]} : vector<34x96xf32> to vector<17x8xf32>
    %56 = vector.extract_strided_slice %26 {offsets = [17, 88], sizes = [17, 8], strides = [1, 1]} : vector<34x96xf32> to vector<17x8xf32>
    %57 = arith.truncf %33 : vector<17x8xf32> to vector<17x8xbf16>
    %58 = arith.truncf %34 : vector<17x8xf32> to vector<17x8xbf16>
    %cst_26 = arith.constant dense<0.000000e+00> : vector<17x17xf32>
    %59 = tpu.matmul %57, %58, %cst_26 {dimension_numbers = #tpu.dot_dimension_numbers<[1], [1], [0], [0], [0, 0, 1, 0], [], []>} : vector<17x8xbf16>, vector<17x8xbf16>, vector<17x17xf32> -> vector<17x17xf32>
    %60 = arith.addf %59, %32 : vector<17x17xf32>
    %61 = arith.truncf %36 : vector<17x8xf32> to vector<17x8xbf16>
    %62 = arith.truncf %37 : vector<17x8xf32> to vector<17x8xbf16>
    %cst_27 = arith.constant dense<0.000000e+00> : vector<17x17xf32>
    %63 = tpu.matmul %61, %62, %cst_27 {dimension_numbers = #tpu.dot_dimension_numbers<[1], [1], [0], [0], [0, 0, 1, 0], [], []>} : vector<17x8xbf16>, vector<17x8xbf16>, vector<17x17xf32> -> vector<17x17xf32>
    %64 = arith.addf %63, %32 : vector<17x17xf32>
    %65 = arith.truncf %39 : vector<17x8xf32> to vector<17x8xbf16>
    %66 = arith.truncf %40 : vector<17x8xf32> to vector<17x8xbf16>
    %cst_28 = arith.constant dense<0.000000e+00> : vector<17x17xf32>
    %67 = tpu.matmul %65, %66, %cst_28 {dimension_numbers = #tpu.dot_dimension_numbers<[1], [1], [0], [0], [0, 0, 1, 0], [], []>} : vector<17x8xbf16>, vector<17x8xbf16>, vector<17x17xf32> -> vector<17x17xf32>
    %68 = arith.addf %67, %32 : vector<17x17xf32>
    %69 = arith.truncf %42 : vector<17x8xf32> to vector<17x8xbf16>
    %70 = arith.truncf %43 : vector<17x8xf32> to vector<17x8xbf16>
    %cst_29 = arith.constant dense<0.000000e+00> : vector<17x17xf32>
    %71 = tpu.matmul %69, %70, %cst_29 {dimension_numbers = #tpu.dot_dimension_numbers<[1], [1], [0], [0], [0, 0, 1, 0], [], []>} : vector<17x8xbf16>, vector<17x8xbf16>, vector<17x17xf32> -> vector<17x17xf32>
    %72 = arith.addf %71, %32 : vector<17x17xf32>
    %73 = arith.truncf %45 : vector<17x8xf32> to vector<17x8xbf16>
    %74 = arith.truncf %46 : vector<17x8xf32> to vector<17x8xbf16>
    %cst_30 = arith.constant dense<0.000000e+00> : vector<17x17xf32>
    %75 = tpu.matmul %73, %74, %cst_30 {dimension_numbers = #tpu.dot_dimension_numbers<[1], [1], [0], [0], [0, 0, 1, 0], [], []>} : vector<17x8xbf16>, vector<17x8xbf16>, vector<17x17xf32> -> vector<17x17xf32>
    %76 = arith.addf %75, %32 : vector<17x17xf32>
    %77 = arith.truncf %48 : vector<17x8xf32> to vector<17x8xbf16>
    %78 = arith.truncf %49 : vector<17x8xf32> to vector<17x8xbf16>
    %cst_31 = arith.constant dense<0.000000e+00> : vector<17x17xf32>
    %79 = tpu.matmul %77, %78, %cst_31 {dimension_numbers = #tpu.dot_dimension_numbers<[1], [1], [0], [0], [0, 0, 1, 0], [], []>} : vector<17x8xbf16>, vector<17x8xbf16>, vector<17x17xf32> -> vector<17x17xf32>
    %80 = arith.addf %79, %32 : vector<17x17xf32>
    %81 = arith.truncf %51 : vector<17x8xf32> to vector<17x8xbf16>
    %82 = arith.truncf %52 : vector<17x8xf32> to vector<17x8xbf16>
    %cst_32 = arith.constant dense<0.000000e+00> : vector<17x17xf32>
    %83 = tpu.matmul %81, %82, %cst_32 {dimension_numbers = #tpu.dot_dimension_numbers<[1], [1], [0], [0], [0, 0, 1, 0], [], []>} : vector<17x8xbf16>, vector<17x8xbf16>, vector<17x17xf32> -> vector<17x17xf32>
    %84 = arith.addf %83, %32 : vector<17x17xf32>
    %85 = arith.truncf %54 : vector<17x8xf32> to vector<17x8xbf16>
    %86 = arith.truncf %55 : vector<17x8xf32> to vector<17x8xbf16>
    %cst_33 = arith.constant dense<0.000000e+00> : vector<17x17xf32>
    %87 = tpu.matmul %85, %86, %cst_33 {dimension_numbers = #tpu.dot_dimension_numbers<[1], [1], [0], [0], [0, 0, 1, 0], [], []>} : vector<17x8xbf16>, vector<17x8xbf16>, vector<17x17xf32> -> vector<17x17xf32>
    %88 = arith.addf %87, %32 : vector<17x17xf32>
    %cst_34 = arith.constant dense<0xFF800000> : vector<17xf32>
    %89 = vector.multi_reduction <maximumf>, %60, %cst_34 [1] : vector<17x17xf32> to vector<17xf32>
    %90 = vector.shape_cast %89 : vector<17xf32> to vector<17x1xf32>
    %91 = vector.broadcast %90 : vector<17x1xf32> to vector<17x17xf32>
    %92 = arith.subf %60, %91 : vector<17x17xf32>
    %93 = math.exp %92 : vector<17x17xf32>
    %cst_35 = arith.constant dense<0.000000e+00> : vector<17xf32>
    %94 = vector.multi_reduction <add>, %93, %cst_35 [1] : vector<17x17xf32> to vector<17xf32>
    %95 = vector.shape_cast %94 : vector<17xf32> to vector<17x1xf32>
    %96 = tpu.reciprocal %95 : vector<17x1xf32> -> vector<17x1xf32>
    %97 = vector.broadcast %96 : vector<17x1xf32> to vector<17x17xf32>
    %98 = arith.mulf %93, %97 : vector<17x17xf32>
    %cst_36 = arith.constant dense<0xFF800000> : vector<17xf32>
    %99 = vector.multi_reduction <maximumf>, %64, %cst_36 [1] : vector<17x17xf32> to vector<17xf32>
    %100 = vector.shape_cast %99 : vector<17xf32> to vector<17x1xf32>
    %101 = vector.broadcast %100 : vector<17x1xf32> to vector<17x17xf32>
    %102 = arith.subf %64, %101 : vector<17x17xf32>
    %103 = math.exp %102 : vector<17x17xf32>
    %cst_37 = arith.constant dense<0.000000e+00> : vector<17xf32>
    %104 = vector.multi_reduction <add>, %103, %cst_37 [1] : vector<17x17xf32> to vector<17xf32>
    %105 = vector.shape_cast %104 : vector<17xf32> to vector<17x1xf32>
    %106 = tpu.reciprocal %105 : vector<17x1xf32> -> vector<17x1xf32>
    %107 = vector.broadcast %106 : vector<17x1xf32> to vector<17x17xf32>
    %108 = arith.mulf %103, %107 : vector<17x17xf32>
    %cst_38 = arith.constant dense<0xFF800000> : vector<17xf32>
    %109 = vector.multi_reduction <maximumf>, %68, %cst_38 [1] : vector<17x17xf32> to vector<17xf32>
    %110 = vector.shape_cast %109 : vector<17xf32> to vector<17x1xf32>
    %111 = vector.broadcast %110 : vector<17x1xf32> to vector<17x17xf32>
    %112 = arith.subf %68, %111 : vector<17x17xf32>
    %113 = math.exp %112 : vector<17x17xf32>
    %cst_39 = arith.constant dense<0.000000e+00> : vector<17xf32>
    %114 = vector.multi_reduction <add>, %113, %cst_39 [1] : vector<17x17xf32> to vector<17xf32>
    %115 = vector.shape_cast %114 : vector<17xf32> to vector<17x1xf32>
    %116 = tpu.reciprocal %115 : vector<17x1xf32> -> vector<17x1xf32>
    %117 = vector.broadcast %116 : vector<17x1xf32> to vector<17x17xf32>
    %118 = arith.mulf %113, %117 : vector<17x17xf32>
    %cst_40 = arith.constant dense<0xFF800000> : vector<17xf32>
    %119 = vector.multi_reduction <maximumf>, %72, %cst_40 [1] : vector<17x17xf32> to vector<17xf32>
    %120 = vector.shape_cast %119 : vector<17xf32> to vector<17x1xf32>
    %121 = vector.broadcast %120 : vector<17x1xf32> to vector<17x17xf32>
    %122 = arith.subf %72, %121 : vector<17x17xf32>
    %123 = math.exp %122 : vector<17x17xf32>
    %cst_41 = arith.constant dense<0.000000e+00> : vector<17xf32>
    %124 = vector.multi_reduction <add>, %123, %cst_41 [1] : vector<17x17xf32> to vector<17xf32>
    %125 = vector.shape_cast %124 : vector<17xf32> to vector<17x1xf32>
    %126 = tpu.reciprocal %125 : vector<17x1xf32> -> vector<17x1xf32>
    %127 = vector.broadcast %126 : vector<17x1xf32> to vector<17x17xf32>
    %128 = arith.mulf %123, %127 : vector<17x17xf32>
    %cst_42 = arith.constant dense<0xFF800000> : vector<17xf32>
    %129 = vector.multi_reduction <maximumf>, %76, %cst_42 [1] : vector<17x17xf32> to vector<17xf32>
    %130 = vector.shape_cast %129 : vector<17xf32> to vector<17x1xf32>
    %131 = vector.broadcast %130 : vector<17x1xf32> to vector<17x17xf32>
    %132 = arith.subf %76, %131 : vector<17x17xf32>
    %133 = math.exp %132 : vector<17x17xf32>
    %cst_43 = arith.constant dense<0.000000e+00> : vector<17xf32>
    %134 = vector.multi_reduction <add>, %133, %cst_43 [1] : vector<17x17xf32> to vector<17xf32>
    %135 = vector.shape_cast %134 : vector<17xf32> to vector<17x1xf32>
    %136 = tpu.reciprocal %135 : vector<17x1xf32> -> vector<17x1xf32>
    %137 = vector.broadcast %136 : vector<17x1xf32> to vector<17x17xf32>
    %138 = arith.mulf %133, %137 : vector<17x17xf32>
    %cst_44 = arith.constant dense<0xFF800000> : vector<17xf32>
    %139 = vector.multi_reduction <maximumf>, %80, %cst_44 [1] : vector<17x17xf32> to vector<17xf32>
    %140 = vector.shape_cast %139 : vector<17xf32> to vector<17x1xf32>
    %141 = vector.broadcast %140 : vector<17x1xf32> to vector<17x17xf32>
    %142 = arith.subf %80, %141 : vector<17x17xf32>
    %143 = math.exp %142 : vector<17x17xf32>
    %cst_45 = arith.constant dense<0.000000e+00> : vector<17xf32>
    %144 = vector.multi_reduction <add>, %143, %cst_45 [1] : vector<17x17xf32> to vector<17xf32>
    %145 = vector.shape_cast %144 : vector<17xf32> to vector<17x1xf32>
    %146 = tpu.reciprocal %145 : vector<17x1xf32> -> vector<17x1xf32>
    %147 = vector.broadcast %146 : vector<17x1xf32> to vector<17x17xf32>
    %148 = arith.mulf %143, %147 : vector<17x17xf32>
    %cst_46 = arith.constant dense<0xFF800000> : vector<17xf32>
    %149 = vector.multi_reduction <maximumf>, %84, %cst_46 [1] : vector<17x17xf32> to vector<17xf32>
    %150 = vector.shape_cast %149 : vector<17xf32> to vector<17x1xf32>
    %151 = vector.broadcast %150 : vector<17x1xf32> to vector<17x17xf32>
    %152 = arith.subf %84, %151 : vector<17x17xf32>
    %153 = math.exp %152 : vector<17x17xf32>
    %cst_47 = arith.constant dense<0.000000e+00> : vector<17xf32>
    %154 = vector.multi_reduction <add>, %153, %cst_47 [1] : vector<17x17xf32> to vector<17xf32>
    %155 = vector.shape_cast %154 : vector<17xf32> to vector<17x1xf32>
    %156 = tpu.reciprocal %155 : vector<17x1xf32> -> vector<17x1xf32>
    %157 = vector.broadcast %156 : vector<17x1xf32> to vector<17x17xf32>
    %158 = arith.mulf %153, %157 : vector<17x17xf32>
    %cst_48 = arith.constant dense<0xFF800000> : vector<17xf32>
    %159 = vector.multi_reduction <maximumf>, %88, %cst_48 [1] : vector<17x17xf32> to vector<17xf32>
    %160 = vector.shape_cast %159 : vector<17xf32> to vector<17x1xf32>
    %161 = vector.broadcast %160 : vector<17x1xf32> to vector<17x17xf32>
    %162 = arith.subf %88, %161 : vector<17x17xf32>
    %163 = math.exp %162 : vector<17x17xf32>
    %cst_49 = arith.constant dense<0.000000e+00> : vector<17xf32>
    %164 = vector.multi_reduction <add>, %163, %cst_49 [1] : vector<17x17xf32> to vector<17xf32>
    %165 = vector.shape_cast %164 : vector<17xf32> to vector<17x1xf32>
    %166 = tpu.reciprocal %165 : vector<17x1xf32> -> vector<17x1xf32>
    %167 = vector.broadcast %166 : vector<17x1xf32> to vector<17x17xf32>
    %168 = arith.mulf %163, %167 : vector<17x17xf32>
    %169 = arith.truncf %98 : vector<17x17xf32> to vector<17x17xbf16>
    %170 = arith.truncf %35 : vector<17x8xf32> to vector<17x8xbf16>
    %cst_50 = arith.constant dense<0.000000e+00> : vector<17x8xf32>
    %171 = tpu.matmul %169, %170, %cst_50 {dimension_numbers = #tpu.dot_dimension_numbers<[1], [0], [0], [1], [0, 0, 1, 1], [], []>} : vector<17x17xbf16>, vector<17x8xbf16>, vector<17x8xf32> -> vector<17x8xf32>
    %172 = arith.truncf %108 : vector<17x17xf32> to vector<17x17xbf16>
    %173 = arith.truncf %38 : vector<17x8xf32> to vector<17x8xbf16>
    %cst_51 = arith.constant dense<0.000000e+00> : vector<17x8xf32>
    %174 = tpu.matmul %172, %173, %cst_51 {dimension_numbers = #tpu.dot_dimension_numbers<[1], [0], [0], [1], [0, 0, 1, 1], [], []>} : vector<17x17xbf16>, vector<17x8xbf16>, vector<17x8xf32> -> vector<17x8xf32>
    %175 = arith.truncf %118 : vector<17x17xf32> to vector<17x17xbf16>
    %176 = arith.truncf %41 : vector<17x8xf32> to vector<17x8xbf16>
    %cst_52 = arith.constant dense<0.000000e+00> : vector<17x8xf32>
    %177 = tpu.matmul %175, %176, %cst_52 {dimension_numbers = #tpu.dot_dimension_numbers<[1], [0], [0], [1], [0, 0, 1, 1], [], []>} : vector<17x17xbf16>, vector<17x8xbf16>, vector<17x8xf32> -> vector<17x8xf32>
    %178 = arith.truncf %128 : vector<17x17xf32> to vector<17x17xbf16>
    %179 = arith.truncf %44 : vector<17x8xf32> to vector<17x8xbf16>
    %cst_53 = arith.constant dense<0.000000e+00> : vector<17x8xf32>
    %180 = tpu.matmul %178, %179, %cst_53 {dimension_numbers = #tpu.dot_dimension_numbers<[1], [0], [0], [1], [0, 0, 1, 1], [], []>} : vector<17x17xbf16>, vector<17x8xbf16>, vector<17x8xf32> -> vector<17x8xf32>
    %181 = arith.truncf %138 : vector<17x17xf32> to vector<17x17xbf16>
    %182 = arith.truncf %47 : vector<17x8xf32> to vector<17x8xbf16>
    %cst_54 = arith.constant dense<0.000000e+00> : vector<17x8xf32>
    %183 = tpu.matmul %181, %182, %cst_54 {dimension_numbers = #tpu.dot_dimension_numbers<[1], [0], [0], [1], [0, 0, 1, 1], [], []>} : vector<17x17xbf16>, vector<17x8xbf16>, vector<17x8xf32> -> vector<17x8xf32>
    %184 = arith.truncf %148 : vector<17x17xf32> to vector<17x17xbf16>
    %185 = arith.truncf %50 : vector<17x8xf32> to vector<17x8xbf16>
    %cst_55 = arith.constant dense<0.000000e+00> : vector<17x8xf32>
    %186 = tpu.matmul %184, %185, %cst_55 {dimension_numbers = #tpu.dot_dimension_numbers<[1], [0], [0], [1], [0, 0, 1, 1], [], []>} : vector<17x17xbf16>, vector<17x8xbf16>, vector<17x8xf32> -> vector<17x8xf32>
    %187 = arith.truncf %158 : vector<17x17xf32> to vector<17x17xbf16>
    %188 = arith.truncf %53 : vector<17x8xf32> to vector<17x8xbf16>
    %cst_56 = arith.constant dense<0.000000e+00> : vector<17x8xf32>
    %189 = tpu.matmul %187, %188, %cst_56 {dimension_numbers = #tpu.dot_dimension_numbers<[1], [0], [0], [1], [0, 0, 1, 1], [], []>} : vector<17x17xbf16>, vector<17x8xbf16>, vector<17x8xf32> -> vector<17x8xf32>
    %190 = arith.truncf %168 : vector<17x17xf32> to vector<17x17xbf16>
    %191 = arith.truncf %56 : vector<17x8xf32> to vector<17x8xbf16>
    %cst_57 = arith.constant dense<0.000000e+00> : vector<17x8xf32>
    %192 = tpu.matmul %190, %191, %cst_57 {dimension_numbers = #tpu.dot_dimension_numbers<[1], [0], [0], [1], [0, 0, 1, 1], [], []>} : vector<17x17xbf16>, vector<17x8xbf16>, vector<17x8xf32> -> vector<17x8xf32>
    %193 = tpu.concatenate %171, %174, %177, %180 in 1 : vector<17x8xf32>, vector<17x8xf32>, vector<17x8xf32>, vector<17x8xf32> -> vector<17x32xf32>
    %194 = tpu.concatenate %183, %186, %189, %192 in 1 : vector<17x8xf32>, vector<17x8xf32>, vector<17x8xf32>, vector<17x8xf32> -> vector<17x32xf32>
    %195 = tpu.concatenate %193, %194 in 0 : vector<17x32xf32>, vector<17x32xf32> -> vector<34x32xf32>
    %196 = arith.truncf %195 : vector<34x32xf32> to vector<34x32xbf16>
    %197 = arith.truncf %2 : vector<32x32xf32> to vector<32x32xbf16>
    %cst_58 = arith.constant dense<0.000000e+00> : vector<34x32xf32>
    %198 = tpu.matmul %196, %197, %cst_58 {dimension_numbers = #tpu.dot_dimension_numbers<[1], [0], [0], [1], [0, 0, 1, 1], [], []>} : vector<34x32xbf16>, vector<32x32xbf16>, vector<34x32xf32> -> vector<34x32xf32>
    %199 = arith.addf %21, %198 : vector<34x32xf32>
    %200 = vector.broadcast %4 : vector<1x32xf32> to vector<34x32xf32>
    %201 = arith.addf %199, %200 : vector<34x32xf32>
    %cst_59 = arith.constant dense<0.000000e+00> : vector<34xf32>
    %202 = vector.multi_reduction <add>, %201, %cst_59 [1] : vector<34x32xf32> to vector<34xf32>
    %203 = vector.shape_cast %202 : vector<34xf32> to vector<34x1xf32>
    %cst_60 = arith.constant 3.200000e+01 : f32
    %204 = vector.broadcast %cst_60 : f32 to vector<34x1xf32>
    %205 = arith.divf %203, %204 : vector<34x1xf32>
    %206 = vector.broadcast %205 : vector<34x1xf32> to vector<34x32xf32>
    %207 = arith.subf %201, %206 : vector<34x32xf32>
    %208 = arith.mulf %207, %207 : vector<34x32xf32>
    %cst_61 = arith.constant dense<0.000000e+00> : vector<34xf32>
    %209 = vector.multi_reduction <add>, %208, %cst_61 [1] : vector<34x32xf32> to vector<34xf32>
    %210 = vector.shape_cast %209 : vector<34xf32> to vector<34x1xf32>
    %cst_62 = arith.constant 3.200000e+01 : f32
    %211 = vector.broadcast %cst_62 : f32 to vector<34x1xf32>
    %212 = arith.divf %210, %211 : vector<34x1xf32>
    %213 = vector.broadcast %205 : vector<34x1xf32> to vector<34x32xf32>
    %214 = arith.subf %201, %213 : vector<34x32xf32>
    %cst_63 = arith.constant 9.99999974E-6 : f32
    %215 = vector.broadcast %cst_63 : f32 to vector<34x1xf32>
    %216 = arith.addf %212, %215 : vector<34x1xf32>
    %217 = math.rsqrt %216 : vector<34x1xf32>
    %218 = vector.broadcast %217 : vector<34x1xf32> to vector<34x32xf32>
    %219 = arith.mulf %214, %218 : vector<34x32xf32>
    %220 = vector.broadcast %5 : vector<1x32xf32> to vector<34x32xf32>
    %221 = arith.mulf %219, %220 : vector<34x32xf32>
    %222 = vector.broadcast %6 : vector<1x32xf32> to vector<34x32xf32>
    %223 = arith.addf %221, %222 : vector<34x32xf32>
    %224 = arith.truncf %223 : vector<34x32xf32> to vector<34x32xbf16>
    %225 = arith.truncf %12 : vector<32x64xf32> to vector<32x64xbf16>
    %cst_64 = arith.constant dense<0.000000e+00> : vector<34x64xf32>
    %226 = tpu.matmul %224, %225, %cst_64 {dimension_numbers = #tpu.dot_dimension_numbers<[1], [0], [0], [1], [0, 0, 1, 1], [], []>} : vector<34x32xbf16>, vector<32x64xbf16>, vector<34x64xf32> -> vector<34x64xf32>
    %227 = vector.broadcast %13 : vector<1x64xf32> to vector<34x64xf32>
    %228 = arith.addf %226, %227 : vector<34x64xf32>
    %229 = arith.mulf %228, %228 : vector<34x64xf32>
    %230 = arith.mulf %228, %229 : vector<34x64xf32>
    %cst_65 = arith.constant 4.471500e-02 : f32
    %231 = vector.broadcast %cst_65 : f32 to vector<34x64xf32>
    %232 = arith.mulf %231, %230 : vector<34x64xf32>
    %233 = arith.addf %228, %232 : vector<34x64xf32>
    %cst_66 = arith.constant 0.797884583 : f32
    %234 = vector.broadcast %cst_66 : f32 to vector<34x64xf32>
    %235 = arith.mulf %234, %233 : vector<34x64xf32>
    %236 = math.tanh %235 : vector<34x64xf32>
    %cst_67 = arith.constant 1.000000e+00 : f32
    %237 = vector.broadcast %cst_67 : f32 to vector<34x64xf32>
    %238 = arith.addf %237, %236 : vector<34x64xf32>
    %cst_68 = arith.constant 5.000000e-01 : f32
    %239 = vector.broadcast %cst_68 : f32 to vector<34x64xf32>
    %240 = arith.mulf %239, %238 : vector<34x64xf32>
    %241 = arith.mulf %228, %240 : vector<34x64xf32>
    %242 = arith.truncf %241 : vector<34x64xf32> to vector<34x64xbf16>
    %243 = arith.truncf %3 : vector<64x32xf32> to vector<64x32xbf16>
    %cst_69 = arith.constant dense<0.000000e+00> : vector<34x32xf32>
    %244 = tpu.matmul %242, %243, %cst_69 {dimension_numbers = #tpu.dot_dimension_numbers<[1], [0], [0], [1], [0, 0, 1, 1], [], []>} : vector<34x64xbf16>, vector<64x32xbf16>, vector<34x32xf32> -> vector<34x32xf32>
    %245 = arith.addf %223, %244 : vector<34x32xf32>
    %246 = vector.broadcast %7 : vector<1x32xf32> to vector<34x32xf32>
    %247 = arith.addf %245, %246 : vector<34x32xf32>
    %cst_70 = arith.constant dense<0.000000e+00> : vector<34xf32>
    %248 = vector.multi_reduction <add>, %247, %cst_70 [1] : vector<34x32xf32> to vector<34xf32>
    %249 = vector.shape_cast %248 : vector<34xf32> to vector<34x1xf32>
    %cst_71 = arith.constant 3.200000e+01 : f32
    %250 = vector.broadcast %cst_71 : f32 to vector<34x1xf32>
    %251 = arith.divf %249, %250 : vector<34x1xf32>
    %252 = vector.broadcast %251 : vector<34x1xf32> to vector<34x32xf32>
    %253 = arith.subf %247, %252 : vector<34x32xf32>
    %254 = arith.mulf %253, %253 : vector<34x32xf32>
    %cst_72 = arith.constant dense<0.000000e+00> : vector<34xf32>
    %255 = vector.multi_reduction <add>, %254, %cst_72 [1] : vector<34x32xf32> to vector<34xf32>
    %256 = vector.shape_cast %255 : vector<34xf32> to vector<34x1xf32>
    %cst_73 = arith.constant 3.200000e+01 : f32
    %257 = vector.broadcast %cst_73 : f32 to vector<34x1xf32>
    %258 = arith.divf %256, %257 : vector<34x1xf32>
    %259 = vector.broadcast %251 : vector<34x1xf32> to vector<34x32xf32>
    %260 = arith.subf %247, %259 : vector<34x32xf32>
    %cst_74 = arith.constant 9.99999974E-6 : f32
    %261 = vector.broadcast %cst_74 : f32 to vector<34x1xf32>
    %262 = arith.addf %258, %261 : vector<34x1xf32>
    %263 = math.rsqrt %262 : vector<34x1xf32>
    %264 = vector.broadcast %263 : vector<34x1xf32> to vector<34x32xf32>
    %265 = arith.mulf %260, %264 : vector<34x32xf32>
    %266 = vector.broadcast %8 : vector<1x32xf32> to vector<34x32xf32>
    %267 = arith.mulf %265, %266 : vector<34x32xf32>
    %268 = vector.broadcast %9 : vector<1x32xf32> to vector<34x32xf32>
    %269 = arith.addf %267, %268 : vector<34x32xf32>
    %270 = vector.extract_strided_slice %269 {offsets = [16, 0], sizes = [1, 32], strides = [1, 1]} : vector<34x32xf32> to vector<1x32xf32>
    %271 = vector.extract_strided_slice %269 {offsets = [33, 0], sizes = [1, 32], strides = [1, 1]} : vector<34x32xf32> to vector<1x32xf32>
    %cst_75 = arith.constant 0.000000e+00 : f32
    %272 = vector.broadcast %cst_75 : f32 to vector<6x32xf32>
    %273 = tpu.concatenate %270, %271, %272 in 0 : vector<1x32xf32>, vector<1x32xf32>, vector<6x32xf32> -> vector<8x32xf32>
    %274 = arith.truncf %273 : vector<8x32xf32> to vector<8x32xbf16>
    %275 = arith.truncf %14 : vector<32x128xf32> to vector<32x128xbf16>
    %cst_76 = arith.constant dense<0.000000e+00> : vector<8x128xf32>
    %276 = tpu.matmul %274, %275, %cst_76 {dimension_numbers = #tpu.dot_dimension_numbers<[1], [0], [0], [1], [0, 0, 1, 1], [], []>} : vector<8x32xbf16>, vector<32x128xbf16>, vector<8x128xf32> -> vector<8x128xf32>
    %277 = vector.broadcast %15 : vector<1x128xf32> to vector<8x128xf32>
    %278 = arith.addf %276, %277 : vector<8x128xf32>
    %c0_77 = arith.constant 0 : index
    %c0_78 = arith.constant 0 : index
    %279 = vector.load %arg4[%c0_77, %c0_78] : memref<8x128xf32, #tpu.memory_space<vmem>>, vector<8x128xf32>
    tpu.vector_store %arg4[%c0_77, %c0_78], %278 {strides = array<i32>} : memref<8x128xf32, #tpu.memory_space<vmem>>, vector<8x128xf32>,
    return
  }
  func.func @transform_0(%arg0: i32) -> (i32, i32) {
    %c0_i32 = arith.constant 0 : i32
    %c0_i32_0 = arith.constant 0 : i32
    %c0_i32_1 = arith.constant 0 : i32
    return %c0_i32, %c0_i32_0 : i32, i32
  }
  func.func @transform_1(%arg0: i32) -> (i32, i32) {
    %c0_i32 = arith.constant 0 : i32
    %c0_i32_0 = arith.constant 0 : i32
    %c0_i32_1 = arith.constant 0 : i32
    return %c0_i32, %c0_i32_0 : i32, i32
  }
  func.func @transform_2(%arg0: i32) -> (i32, i32) {
    %c0_i32 = arith.constant 0 : i32
    %c0_i32_0 = arith.constant 0 : i32
    %c0_i32_1 = arith.constant 0 : i32
    return %c0_i32, %c0_i32_0 : i32, i32
  }
  func.func @transform_3(%arg0: i32) -> (i32, i32) {
    %c0_i32 = arith.constant 0 : i32
    %c0_i32_0 = arith.constant 0 : i32
    %c0_i32_1 = arith.constant 0 : i32
    return %c0_i32, %c0_i32_0 : i32, i32
  }
}

</mosaic_0001>

<llo_original>
// kernel: cross_ts_forward.1
$region0: #{cross_ts_forward.1}
  #allocation0 [shape = 'u32[]', space=smem, size = 0x4, offset = 0x4, fixed_abs, tag = 'smem constant byte address 0x4 - core index']
  #allocation1 [shape = 'u32[144,128]{1,0:T(1,128)}', space=vmem, size = 0x12000, scoped, tag = 'internal scratch']
  %s0 = inlined_call_operand.vmem [shape: f32[34,4], index: 0, kind: input, shape index: {}]
  %s1 = inlined_call_operand.vmem [shape: f32[136,32], index: 1, kind: input, shape index: {}]
  %s2 = inlined_call_operand.vmem [shape: f32[33,384], index: 2, kind: input, shape index: {}]
  %s3 = inlined_call_operand.vmem [shape: f32[8,128], index: 3, kind: output, shape index: {}]
  %s4 = sld [smem:[#allocation0]]
  $region22: #{cross_ts_forward.1} parent=0
    _
  %s6 = ssub.s32 1, %s4
  %s7 = scalar_select 0, %s6, %s4
  // Predicated region
  $region2: #{cross_ts_forward.1} parent=0 // pred_check
    _
  $region3: #{cross_ts_forward.1} parent=0 // pred_check_branch
    %9 = sbr.rel (0) target = $region5
  $region4: #{cross_ts_forward.1} parent=0 // pred_region
    _
  $region5: #{cross_ts_forward.1} parent=0 // pred_fallthru
    _
  // Predicated region
  $region6: #{cross_ts_forward.1} parent=0 // pred_check
    _
  $region7: #{cross_ts_forward.1} parent=0 // pred_check_branch
    %11 = sbr.rel (0) target = $region9
  $region8: #{cross_ts_forward.1} parent=0 // pred_region
    _
  $region9: #{cross_ts_forward.1} parent=0 // pred_fallthru
    _
  // Predicated region
  $region10: #{cross_ts_forward.1} parent=0 // pred_check
    _
  $region11: #{cross_ts_forward.1} parent=0 // pred_check_branch
    %13 = sbr.rel (0) target = $region13
  $region12: #{cross_ts_forward.1} parent=0 // pred_region
    _
  $region13: #{cross_ts_forward.1} parent=0 // pred_fallthru
    _
  %v15 = vld [vmem:[%s1] sm:$0xf]
  %v16 = vld [vmem:[%s1 + $0x8] sm:$0xff]
  %v17 = vld [vmem:[%s1 + $0x10] sm:$0xff]
  %v18 = vld [vmem:[%s1 + $0x18] sm:$0x1]
  %v19 = vld [vmem:[%s1 + $0x20] sm:$0xff]
  %v20 = vld [vmem:[%s1 + $0x28] sm:$0xff]
  %v21 = vld [vmem:[%s1 + $0x30] sm:$0xff]
  %v22 = vld [vmem:[%s1 + $0x38] sm:$0xff]
  %v23 = vld [vmem:[%s1 + $0x40] sm:$0xff]
  %v24 = vld [vmem:[%s1 + $0x48] sm:$0xff]
  %v25 = vld [vmem:[%s1 + $0x50] sm:$0xff]
  %v26 = vld [vmem:[%s1 + $0x58] sm:$0xff]
  %v27 = vld [vmem:[%s1 + $0x60] sm:$0xff]
  %v28 = vld [vmem:[%s1 + $0x68] sm:$0xff]
  %v29 = vld [vmem:[%s1 + $0x70] sm:$0xff]
  %v30 = vld [vmem:[%s1 + $0x78] sm:$0xff]
  %v31 = vld [vmem:[%s1 + $0x80] sm:$0x1]
  %v32 = vld [vmem:[%s1 + $0x81] sm:$0x1]
  %v33 = vld [vmem:[%s1 + $0x82] sm:$0x1]
  %v34 = vld [vmem:[%s1 + $0x83] sm:$0x1]
  %v35 = vld [vmem:[%s1 + $0x84] sm:$0x1]
  %v36 = vld [vmem:[%s1 + $0x85] sm:$0x1]
  %v37 = vld [vmem:[%s2] sm:$0xff]
  %v38 = vld [vmem:[%s2 + $0x18] sm:$0xff]
  %v39 = vld [vmem:[%s2 + $0x30] sm:$0xff]
  %v40 = vld [vmem:[%s2 + $0x48] sm:$0xff]
  %v41 = vld [vmem:[%s2 + $0x60] ss:$0 sm:$0xff]
  %v42 = vld [vmem:[%s2 + $0x8] sm:$0xff]
  %v43 = vld [vmem:[%s2 + $0x20] sm:$0xff]
  %v44 = vld [vmem:[%s2 + $0x38] sm:$0xff]
  %v45 = vld [vmem:[%s2 + $0x50] sm:$0xff]
  %v46 = vld [vmem:[%s2 + $0x68] ss:$0 sm:$0xff]
  %v47 = vld [vmem:[%s2 + $0x10] sm:$0xff]
  %v48 = vld [vmem:[%s2 + $0x28] sm:$0xff]
  %v49 = vld [vmem:[%s2 + $0x40] sm:$0xff]
  %v50 = vld [vmem:[%s2 + $0x58] sm:$0xff]
  %v51 = vld [vmem:[%s2 + $0x70] ss:$0 sm:$0xff]
  %v52 = vld [vmem:[%s0] sm:$0xff]
  %v53 = vld [vmem:[%s0 + $0x8] sm:$0xff]
  %v54 = vld [vmem:[%s0 + $0x10] sm:$0xff]
  %v55 = vld [vmem:[%s0 + $0x18] sm:$0xff]
  %v56 = vld [vmem:[%s0 + $0x20] sm:$0x3]
  %v57 = vpack.c.bf16 %v53, %v52
  %v58 = vpack.c.bf16 %v55, %v54
  %v59 = vpack.c.bf16 %v56, %v56
  %v60 = vpack.c.bf16 %v15, %v15
  %vm64 = vcmask 1040384
  %v65 = vrot.slane %v16, 7
  %v66 = vrot.slane %v17, 7
  %v67 = vsel %vm64, %v65, %v66
  %v68 = vrot.slane %v18, 7
  %v69 = vsel %vm64, %v66, %v68
  %v73 = vsel %vm64, %v18, %v65
  %vm74 = vcmask 31744
  %v76 = vsel %vm74, %v57, 0
  %v79 = vsel %vm74, %v58, 0
  %v82 = vsel %vm74, %v59, 0
  %vm84 = vcmask 1041408
  %v86 = vsel %vm84, %v60, 0
  %88 = vmatprep.subr.bf16.mxu0 0
  %89 = vmatpush1.bf16.msra.mxu0 0
  %90 = vmatprep.subr.bf16.mxu0 0
  %91 = vmatpush1.bf16.msra.mxu0 0
  %92 = vmatprep.subr.bf16.mxu0 0
  %93 = vmatpush1.bf16.msra.mxu0 0
  %94 = vmatprep.subr.bf16.mxu0 0
  %95 = vmatpush1.bf16.msra.mxu0 0
  %96 = vmatprep.subr.bf16.mxu0 0
  %97 = vmatpush1.bf16.msra.mxu0 0
  %98 = vmatprep.subr.bf16.mxu0 0
  %99 = vmatpush1.bf16.msra.mxu0 0
  %100 = vmatprep.subr.bf16.mxu0 0
  %101 = vmatpush1.bf16.msra.mxu0 0
  %102 = vmatprep.subr.bf16.mxu0 0
  %103 = vmatpush1.bf16.msra.mxu0 %v86
  %104 = vmatprep.subr.bf16.mxu0 0
  %105 = vmatpush2.bf16.msra.mxu0 0
  %106 = vmatprep.subr.bf16.mxu0 0
  %107 = vmatpush2.bf16.msra.mxu0 0
  %108 = vmatprep.subr.bf16.mxu0 0
  %109 = vmatpush2.bf16.msra.mxu0 0
  %110 = vmatprep.subr.bf16.mxu0 0
  %111 = vmatpush2.bf16.msra.mxu0 0
  %112 = vmatprep.subr.bf16.mxu0 0
  %113 = vmatpush2.bf16.msra.mxu0 0
  %114 = vmatprep.subr.bf16.mxu0 0
  %115 = vmatpush2.bf16.msra.mxu0 0
  %116 = vmatprep.subr.bf16.mxu0 0
  %117 = vmatpush2.bf16.msra.mxu0 0
  %118 = vmatprep.subr.bf16.mxu0 0
  %119 = vmatpush2.bf16.msra.mxu0 0
  %120 = vmatprep.mubr.bf16.mxu0 0
  %121 = vmatmul.mubr.bf16.gmra.mxu0 %v76
  %v122 = vpop.f32.mrf.mxu0
  %v123 = vadd.f32 %v16, %v122
  %v124 = vpop.f32.mrf.mxu0
  %v125 = vpop.f32.mrf.mxu0
  %v126 = vadd.f32 %v17, %v125
  %v127 = vpop.f32.mrf.mxu0
  %128 = vmatprep.mubr.bf16.mxu0 0
  %129 = vmatmul.mubr.bf16.gmra.mxu0 %v79
  %v130 = vpop.f32.mrf.mxu0
  %v131 = vadd.f32 %v73, %v130
  %v132 = vpop.f32.mrf.mxu0
  %v133 = vpop.f32.mrf.mxu0
  %v134 = vadd.f32 %v67, %v133
  %v135 = vpop.f32.mrf.mxu0
  %136 = vmatprep.mubr.bf16.mxu0 0
  %137 = vmatmul.mubr.bf16.gmra.mxu0 %v82
  %v138 = vpop.f32.mrf.mxu0
  %v139 = vadd.f32 %v69, %v138
  %v140 = vpop.f32.mrf.mxu0
  %v141 = vpop.f32.mrf.mxu0
  %v142 = vpop.f32.mrf.mxu0
  %143 = vdwg.mxu0
  %v144 = vpack.c.bf16 %v126, %v123
  %v145 = vpack.c.bf16 %v134, %v131
  %v146 = vpack.c.bf16 %v139, %v139
  %v147 = vpack.c.bf16 %v38, %v37
  %v148 = vpack.c.bf16 %v40, %v39
  %vm149 = vcmask 261120
  %v151 = vsel %vm149, %v144, 0
  %v154 = vsel %vm149, %v145, 0
  %v157 = vsel %vm149, %v146, 0
  %159 = vmatprep.subr.bf16.mxu0 0
  %160 = vmatpush1.bf16.msra.mxu0 0
  %161 = vmatprep.subr.bf16.mxu0 0
  %162 = vmatpush1.bf16.msra.mxu0 0
  %163 = vmatprep.subr.bf16.mxu0 0
  %164 = vmatpush1.bf16.msra.mxu0 0
  %165 = vmatprep.subr.bf16.mxu0 0
  %166 = vmatpush1.bf16.msra.mxu0 0
  %167 = vmatprep.subr.bf16.mxu0 0
  %168 = vmatpush1.bf16.msra.mxu0 0
  %169 = vmatprep.subr.bf16.mxu0 0
  %170 = vmatpush1.bf16.msra.mxu0 0
  %171 = vmatprep.subr.bf16.mxu0 0
  %172 = vmatpush1.bf16.msra.mxu0 %v148
  %173 = vmatprep.subr.bf16.mxu0 0
  %174 = vmatpush1.bf16.msra.mxu0 %v147
  %175 = vmatprep.subr.bf16.mxu0 0
  %176 = vmatpush2.bf16.msra.mxu0 0
  %177 = vmatprep.subr.bf16.mxu0 0
  %178 = vmatpush2.bf16.msra.mxu0 0
  %179 = vmatprep.subr.bf16.mxu0 0
  %180 = vmatpush2.bf16.msra.mxu0 0
  %181 = vmatprep.subr.bf16.mxu0 0
  %182 = vmatpush2.bf16.msra.mxu0 0
  %183 = vmatprep.subr.bf16.mxu0 0
  %184 = vmatpush2.bf16.msra.mxu0 0
  %185 = vmatprep.subr.bf16.mxu0 0
  %186 = vmatpush2.bf16.msra.mxu0 0
  %187 = vmatprep.subr.bf16.mxu0 0
  %188 = vmatpush2.bf16.msra.mxu0 0
  %189 = vmatprep.subr.bf16.mxu0 0
  %190 = vmatpush2.bf16.msra.mxu0 0
  %191 = vmatprep.mubr.bf16.mxu0 0
  %192 = vmatmul.mubr.bf16.gmra.mxu0 %v151
  %v193 = vpop.f32.mrf.mxu0
  %v194 = vadd.f32 %v41, %v193
  %v195 = vpop.f32.mrf.mxu0
  %v196 = vpop.f32.mrf.mxu0
  %v197 = vadd.f32 %v41, %v196
  %v198 = vpop.f32.mrf.mxu0
  %199 = vmatprep.mubr.bf16.mxu0 0
  %200 = vmatmul.mubr.bf16.gmra.mxu0 %v154
  %v201 = vpop.f32.mrf.mxu0
  %v202 = vadd.f32 %v41, %v201
  %v203 = vpop.f32.mrf.mxu0
  %v204 = vpop.f32.mrf.mxu0
  %v205 = vadd.f32 %v41, %v204
  %v206 = vpop.f32.mrf.mxu0
  %207 = vmatprep.mubr.bf16.mxu0 0
  %208 = vmatmul.mubr.bf16.gmra.mxu0 %v157
  %v209 = vpop.f32.mrf.mxu0
  %v210 = vadd.f32 %v41, %v209
  %v211 = vpop.f32.mrf.mxu0
  %v212 = vpop.f32.mrf.mxu0
  %v213 = vpop.f32.mrf.mxu0
  %214 = vdwg.mxu0
  %v215 = vlaneseq
  %v216 = vshrl.u32 %v215, 7
  %v217 = vadd.s32 %v216, 8
  %v218 = vadd.s32 %v216, 16
  %v219 = vlaneseq
  %v220 = vand.u32 %v219, 127
  %vm221 = vcmp.le.s32.totalorder %v220, %v216
  %vm222 = vcmp.le.s32.totalorder %v220, %v217
  %vm223 = vcmp.le.s32.totalorder %v220, %v218
  %v224 = vsel %vm221, 0.0, -1e+09
  %v225 = vsel %vm222, 0.0, -1e+09
  %v226 = vsel %vm223, 0.0, -1e+09
  %v227 = vpack.c.bf16 %v197, %v194
  %v228 = vpack.c.bf16 %v202, %v202
  %231 = vrot.lane.b32.xlu0 %v227, 96
  %v232 = vpop.permute.xlu0 %231
  %233 = vrot.lane.b32.xlu0 %v228, 96
  %v234 = vpop.permute.xlu0 %233
  %vm235 = vcmask 64512
  %v237 = vsel %vm235, %v227, 0
  %v240 = vsel %vm235, %v228, 0
  %v243 = vsel %vm235, %v232, 0
  %v246 = vsel %vm235, %v234, 0
  %248 = vmatprep.subr.bf16.mxu0 0
  %249 = vmatpush1.bf16.xpose.msra.mxu0 0
  %250 = vmatprep.subr.bf16.mxu0 0
  %251 = vmatpush1.bf16.xpose.msra.mxu0 0
  %252 = vmatprep.subr.bf16.mxu0 0
  %253 = vmatpush1.bf16.xpose.msra.mxu0 0
  %254 = vmatprep.subr.bf16.mxu0 0
  %255 = vmatpush1.bf16.xpose.msra.mxu0 0
  %256 = vmatprep.subr.bf16.mxu0 0
  %257 = vmatpush1.bf16.xpose.msra.mxu0 0
  %258 = vmatprep.subr.bf16.mxu0 0
  %259 = vmatpush1.bf16.xpose.msra.mxu0 0
  %260 = vmatprep.subr.bf16.mxu0 0
  %261 = vmatpush1.bf16.xpose.msra.mxu0 %v246
  %262 = vmatprep.subr.bf16.mxu0 0
  %263 = vmatpush1.bf16.xpose.msra.mxu0 %v243
  %264 = vmatprep.subr.bf16.mxu0 0
  %265 = vmatpush2.bf16.xpose.msra.mxu0 0
  %266 = vmatprep.subr.bf16.mxu0 0
  %267 = vmatpush2.bf16.xpose.msra.mxu0 0
  %268 = vmatprep.subr.bf16.mxu0 0
  %269 = vmatpush2.bf16.xpose.msra.mxu0 0
  %270 = vmatprep.subr.bf16.mxu0 0
  %271 = vmatpush2.bf16.xpose.msra.mxu0 0
  %272 = vmatprep.subr.bf16.mxu0 0
  %273 = vmatpush2.bf16.xpose.msra.mxu0 0
  %274 = vmatprep.subr.bf16.mxu0 0
  %275 = vmatpush2.bf16.xpose.msra.mxu0 0
  %276 = vmatprep.subr.bf16.mxu0 0
  %277 = vmatpush2.bf16.xpose.msra.mxu0 0
  %278 = vmatprep.subr.bf16.mxu0 0
  %279 = vmatpush2.bf16.xpose.msra.mxu0 0
  %280 = vmatprep.mubr.bf16.mxu0 0
  %281 = vmatmul.mubr.bf16.gmra.mxu0 %v237
  %v282 = vpop.f32.mrf.mxu0
  %v283 = vadd.f32 %v224, %v282
  %v284 = vpop.f32.mrf.mxu0
  %v285 = vpop.f32.mrf.mxu0
  %v286 = vadd.f32 %v225, %v285
  %v287 = vpop.f32.mrf.mxu0
  %288 = vmatprep.mubr.bf16.mxu0 0
  %289 = vmatmul.mubr.bf16.gmra.mxu0 %v240
  %v290 = vpop.f32.mrf.mxu0
  %v291 = vadd.f32 %v226, %v290
  %v292 = vpop.f32.mrf.mxu0
  %v293 = vpop.f32.mrf.mxu0
  %v294 = vpop.f32.mrf.mxu0
  %295 = vdwg.mxu0
  %296 = vrot.lane.b32.xlu0 %v227, 120
  %v297 = vpop.permute.xlu0 %296
  %298 = vrot.lane.b32.xlu0 %v228, 120
  %v299 = vpop.permute.xlu0 %298
  %300 = vrot.lane.b32.xlu0 %v227, 88
  %v301 = vpop.permute.xlu0 %300
  %302 = vrot.lane.b32.xlu0 %v228, 88
  %v303 = vpop.permute.xlu0 %302
  %v305 = vsel %vm235, %v297, 0
  %v308 = vsel %vm235, %v299, 0
  %v311 = vsel %vm235, %v301, 0
  %v314 = vsel %vm235, %v303, 0
  %316 = vmatprep.subr.bf16.mxu0 0
  %317 = vmatpush1.bf16.xpose.msra.mxu0 0
  %318 = vmatprep.subr.bf16.mxu0 0
  %319 = vmatpush1.bf16.xpose.msra.mxu0 0
  %320 = vmatprep.subr.bf16.mxu0 0
  %321 = vmatpush1.bf16.xpose.msra.mxu0 0
  %322 = vmatprep.subr.bf16.mxu0 0
  %323 = vmatpush1.bf16.xpose.msra.mxu0 0
  %324 = vmatprep.subr.bf16.mxu0 0
  %325 = vmatpush1.bf16.xpose.msra.mxu0 0
  %326 = vmatprep.subr.bf16.mxu0 0
  %327 = vmatpush1.bf16.xpose.msra.mxu0 0
  %328 = vmatprep.subr.bf16.mxu0 0
  %329 = vmatpush1.bf16.xpose.msra.mxu0 %v314
  %330 = vmatprep.subr.bf16.mxu0 0
  %331 = vmatpush1.bf16.xpose.msra.mxu0 %v311
  %332 = vmatprep.subr.bf16.mxu0 0
  %333 = vmatpush2.bf16.xpose.msra.mxu0 0
  %334 = vmatprep.subr.bf16.mxu0 0
  %335 = vmatpush2.bf16.xpose.msra.mxu0 0
  %336 = vmatprep.subr.bf16.mxu0 0
  %337 = vmatpush2.bf16.xpose.msra.mxu0 0
  %338 = vmatprep.subr.bf16.mxu0 0
  %339 = vmatpush2.bf16.xpose.msra.mxu0 0
  %340 = vmatprep.subr.bf16.mxu0 0
  %341 = vmatpush2.bf16.xpose.msra.mxu0 0
  %342 = vmatprep.subr.bf16.mxu0 0
  %343 = vmatpush2.bf16.xpose.msra.mxu0 0
  %344 = vmatprep.subr.bf16.mxu0 0
  %345 = vmatpush2.bf16.xpose.msra.mxu0 0
  %346 = vmatprep.subr.bf16.mxu0 0
  %347 = vmatpush2.bf16.xpose.msra.mxu0 0
  %348 = vmatprep.mubr.bf16.mxu0 0
  %349 = vmatmul.mubr.bf16.gmra.mxu0 %v305
  %v350 = vpop.f32.mrf.mxu0
  %v351 = vadd.f32 %v224, %v350
  %v352 = vpop.f32.mrf.mxu0
  %v353 = vpop.f32.mrf.mxu0
  %v354 = vadd.f32 %v225, %v353
  %v355 = vpop.f32.mrf.mxu0
  %356 = vmatprep.mubr.bf16.mxu0 0
  %357 = vmatmul.mubr.bf16.gmra.mxu0 %v308
  %v358 = vpop.f32.mrf.mxu0
  %v359 = vadd.f32 %v226, %v358
  %v360 = vpop.f32.mrf.mxu0
  %v361 = vpop.f32.mrf.mxu0
  %v362 = vpop.f32.mrf.mxu0
  %363 = vdwg.mxu0
  %364 = vrot.lane.b32.xlu0 %v227, 112
  %v365 = vpop.permute.xlu0 %364
  %366 = vrot.lane.b32.xlu0 %v228, 112
  %v367 = vpop.permute.xlu0 %366
  %368 = vrot.lane.b32.xlu0 %v227, 80
  %v369 = vpop.permute.xlu0 %368
  %370 = vrot.lane.b32.xlu0 %v228, 80
  %v371 = vpop.permute.xlu0 %370
  %v373 = vsel %vm235, %v365, 0
  %v376 = vsel %vm235, %v367, 0
  %v379 = vsel %vm235, %v369, 0
  %v382 = vsel %vm235, %v371, 0
  %384 = vmatprep.subr.bf16.mxu0 0
  %385 = vmatpush1.bf16.xpose.msra.mxu0 0
  %386 = vmatprep.subr.bf16.mxu0 0
  %387 = vmatpush1.bf16.xpose.msra.mxu0 0
  %388 = vmatprep.subr.bf16.mxu0 0
  %389 = vmatpush1.bf16.xpose.msra.mxu0 0
  %390 = vmatprep.subr.bf16.mxu0 0
  %391 = vmatpush1.bf16.xpose.msra.mxu0 0
  %392 = vmatprep.subr.bf16.mxu0 0
  %393 = vmatpush1.bf16.xpose.msra.mxu0 0
  %394 = vmatprep.subr.bf16.mxu0 0
  %395 = vmatpush1.bf16.xpose.msra.mxu0 0
  %396 = vmatprep.subr.bf16.mxu0 0
  %397 = vmatpush1.bf16.xpose.msra.mxu0 %v382
  %398 = vmatprep.subr.bf16.mxu0 0
  %399 = vmatpush1.bf16.xpose.msra.mxu0 %v379
  %400 = vmatprep.subr.bf16.mxu0 0
  %401 = vmatpush2.bf16.xpose.msra.mxu0 0
  %402 = vmatprep.subr.bf16.mxu0 0
  %403 = vmatpush2.bf16.xpose.msra.mxu0 0
  %404 = vmatprep.subr.bf16.mxu0 0
  %405 = vmatpush2.bf16.xpose.msra.mxu0 0
  %406 = vmatprep.subr.bf16.mxu0 0
  %407 = vmatpush2.bf16.xpose.msra.mxu0 0
  %408 = vmatprep.subr.bf16.mxu0 0
  %409 = vmatpush2.bf16.xpose.msra.mxu0 0
  %410 = vmatprep.subr.bf16.mxu0 0
  %411 = vmatpush2.bf16.xpose.msra.mxu0 0
  %412 = vmatprep.subr.bf16.mxu0 0
  %413 = vmatpush2.bf16.xpose.msra.mxu0 0
  %414 = vmatprep.subr.bf16.mxu0 0
  %415 = vmatpush2.bf16.xpose.msra.mxu0 0
  %416 = vmatprep.mubr.bf16.mxu0 0
  %417 = vmatmul.mubr.bf16.gmra.mxu0 %v373
  %v418 = vpop.f32.mrf.mxu0
  %v419 = vadd.f32 %v224, %v418
  %v420 = vpop.f32.mrf.mxu0
  %v421 = vpop.f32.mrf.mxu0
  %v422 = vadd.f32 %v225, %v421
  %v423 = vpop.f32.mrf.mxu0
  %424 = vmatprep.mubr.bf16.mxu0 0
  %425 = vmatmul.mubr.bf16.gmra.mxu0 %v376
  %v426 = vpop.f32.mrf.mxu0
  %v427 = vadd.f32 %v226, %v426
  %v428 = vpop.f32.mrf.mxu0
  %v429 = vpop.f32.mrf.mxu0
  %v430 = vpop.f32.mrf.mxu0
  %431 = vdwg.mxu0
  %432 = vrot.lane.b32.xlu0 %v227, 104
  %v433 = vpop.permute.xlu0 %432
  %434 = vrot.lane.b32.xlu0 %v228, 104
  %v435 = vpop.permute.xlu0 %434
  %436 = vrot.lane.b32.xlu0 %v227, 72
  %v437 = vpop.permute.xlu0 %436
  %438 = vrot.lane.b32.xlu0 %v228, 72
  %v439 = vpop.permute.xlu0 %438
  %v441 = vsel %vm235, %v433, 0
  %v444 = vsel %vm235, %v435, 0
  %v447 = vsel %vm235, %v437, 0
  %v450 = vsel %vm235, %v439, 0
  %452 = vmatprep.subr.bf16.mxu0 0
  %453 = vmatpush1.bf16.xpose.msra.mxu0 0
  %454 = vmatprep.subr.bf16.mxu0 0
  %455 = vmatpush1.bf16.xpose.msra.mxu0 0
  %456 = vmatprep.subr.bf16.mxu0 0
  %457 = vmatpush1.bf16.xpose.msra.mxu0 0
  %458 = vmatprep.subr.bf16.mxu0 0
  %459 = vmatpush1.bf16.xpose.msra.mxu0 0
  %460 = vmatprep.subr.bf16.mxu0 0
  %461 = vmatpush1.bf16.xpose.msra.mxu0 0
  %462 = vmatprep.subr.bf16.mxu0 0
  %463 = vmatpush1.bf16.xpose.msra.mxu0 0
  %464 = vmatprep.subr.bf16.mxu0 0
  %465 = vmatpush1.bf16.xpose.msra.mxu0 %v450
  %466 = vmatprep.subr.bf16.mxu0 0
  %467 = vmatpush1.bf16.xpose.msra.mxu0 %v447
  %468 = vmatprep.subr.bf16.mxu0 0
  %469 = vmatpush2.bf16.xpose.msra.mxu0 0
  %470 = vmatprep.subr.bf16.mxu0 0
  %471 = vmatpush2.bf16.xpose.msra.mxu0 0
  %472 = vmatprep.subr.bf16.mxu0 0
  %473 = vmatpush2.bf16.xpose.msra.mxu0 0
  %474 = vmatprep.subr.bf16.mxu0 0
  %475 = vmatpush2.bf16.xpose.msra.mxu0 0
  %476 = vmatprep.subr.bf16.mxu0 0
  %477 = vmatpush2.bf16.xpose.msra.mxu0 0
  %478 = vmatprep.subr.bf16.mxu0 0
  %479 = vmatpush2.bf16.xpose.msra.mxu0 0
  %480 = vmatprep.subr.bf16.mxu0 0
  %481 = vmatpush2.bf16.xpose.msra.mxu0 0
  %482 = vmatprep.subr.bf16.mxu0 0
  %483 = vmatpush2.bf16.xpose.msra.mxu0 0
  %484 = vmatprep.mubr.bf16.mxu0 0
  %485 = vmatmul.mubr.bf16.gmra.mxu0 %v441
  %v486 = vpop.f32.mrf.mxu0
  %v487 = vadd.f32 %v224, %v486
  %v488 = vpop.f32.mrf.mxu0
  %v489 = vpop.f32.mrf.mxu0
  %v490 = vadd.f32 %v225, %v489
  %v491 = vpop.f32.mrf.mxu0
  %492 = vmatprep.mubr.bf16.mxu0 0
  %493 = vmatmul.mubr.bf16.gmra.mxu0 %v444
  %v494 = vpop.f32.mrf.mxu0
  %v495 = vadd.f32 %v226, %v494
  %v496 = vpop.f32.mrf.mxu0
  %v497 = vpop.f32.mrf.mxu0
  %v498 = vpop.f32.mrf.mxu0
  %499 = vdwg.mxu0
  %v500 = vpack.c.bf16 %v205, %v202
  %v501 = vpack.c.bf16 %v210, %v210
  %vm502 = vsmask.f32 7424
  %v504 = vshrl.u32 %v500, 16
  %v506 = vshll.u32 %v500, 16
  %v508 = vrot.slane %v506, 1
  %v509 = vor.u32 %v504, %v508
  %v511 = vshll.u32 %v501, 16
  %v513 = vrot.slane %v511, 1
  %v514 = vsel %vm502, %v509, %v513
  %v515 = vshrl.u32 %v501, 16
  %517 = vrot.lane.b32.xlu0 %v514, 96
  %v518 = vpop.permute.xlu0 %517
  %519 = vrot.lane.b32.xlu0 %v515, 96
  %v520 = vpop.permute.xlu0 %519
  %v522 = vsel %vm235, %v514, 0
  %v525 = vsel %vm235, %v515, 0
  %v528 = vsel %vm235, %v518, 0
  %v531 = vsel %vm235, %v520, 0
  %533 = vmatprep.subr.bf16.mxu0 0
  %534 = vmatpush1.bf16.xpose.msra.mxu0 0
  %535 = vmatprep.subr.bf16.mxu0 0
  %536 = vmatpush1.bf16.xpose.msra.mxu0 0
  %537 = vmatprep.subr.bf16.mxu0 0
  %538 = vmatpush1.bf16.xpose.msra.mxu0 0
  %539 = vmatprep.subr.bf16.mxu0 0
  %540 = vmatpush1.bf16.xpose.msra.mxu0 0
  %541 = vmatprep.subr.bf16.mxu0 0
  %542 = vmatpush1.bf16.xpose.msra.mxu0 0
  %543 = vmatprep.subr.bf16.mxu0 0
  %544 = vmatpush1.bf16.xpose.msra.mxu0 0
  %545 = vmatprep.subr.bf16.mxu0 0
  %546 = vmatpush1.bf16.xpose.msra.mxu0 %v531
  %547 = vmatprep.subr.bf16.mxu0 0
  %548 = vmatpush1.bf16.xpose.msra.mxu0 %v528
  %549 = vmatprep.subr.bf16.mxu0 0
  %550 = vmatpush2.bf16.xpose.msra.mxu0 0
  %551 = vmatprep.subr.bf16.mxu0 0
  %552 = vmatpush2.bf16.xpose.msra.mxu0 0
  %553 = vmatprep.subr.bf16.mxu0 0
  %554 = vmatpush2.bf16.xpose.msra.mxu0 0
  %555 = vmatprep.subr.bf16.mxu0 0
  %556 = vmatpush2.bf16.xpose.msra.mxu0 0
  %557 = vmatprep.subr.bf16.mxu0 0
  %558 = vmatpush2.bf16.xpose.msra.mxu0 0
  %559 = vmatprep.subr.bf16.mxu0 0
  %560 = vmatpush2.bf16.xpose.msra.mxu0 0
  %561 = vmatprep.subr.bf16.mxu0 0
  %562 = vmatpush2.bf16.xpose.msra.mxu0 0
  %563 = vmatprep.subr.bf16.mxu0 0
  %564 = vmatpush2.bf16.xpose.msra.mxu0 0
  %565 = vmatprep.mubr.bf16.mxu0 0
  %566 = vmatmul.mubr.bf16.gmra.mxu0 %v522
  %v567 = vpop.f32.mrf.mxu0
  %v568 = vadd.f32 %v224, %v567
  %v569 = vpop.f32.mrf.mxu0
  %v570 = vpop.f32.mrf.mxu0
  %v571 = vadd.f32 %v225, %v570
  %v572 = vpop.f32.mrf.mxu0
  %573 = vmatprep.mubr.bf16.mxu0 0
  %574 = vmatmul.mubr.bf16.gmra.mxu0 %v525
  %v575 = vpop.f32.mrf.mxu0
  %v576 = vadd.f32 %v226, %v575
  %v577 = vpop.f32.mrf.mxu0
  %v578 = vpop.f32.mrf.mxu0
  %v579 = vpop.f32.mrf.mxu0
  %580 = vdwg.mxu0
  %581 = vrot.lane.b32.xlu0 %v514, 120
  %v582 = vpop.permute.xlu0 %581
  %583 = vrot.lane.b32.xlu0 %v515, 120
  %v584 = vpop.permute.xlu0 %583
  %585 = vrot.lane.b32.xlu0 %v514, 88
  %v586 = vpop.permute.xlu0 %585
  %587 = vrot.lane.b32.xlu0 %v515, 88
  %v588 = vpop.permute.xlu0 %587
  %v590 = vsel %vm235, %v582, 0
  %v593 = vsel %vm235, %v584, 0
  %v596 = vsel %vm235, %v586, 0
  %v599 = vsel %vm235, %v588, 0
  %601 = vmatprep.subr.bf16.mxu0 0
  %602 = vmatpush1.bf16.xpose.msra.mxu0 0
  %603 = vmatprep.subr.bf16.mxu0 0
  %604 = vmatpush1.bf16.xpose.msra.mxu0 0
  %605 = vmatprep.subr.bf16.mxu0 0
  %606 = vmatpush1.bf16.xpose.msra.mxu0 0
  %607 = vmatprep.subr.bf16.mxu0 0
  %608 = vmatpush1.bf16.xpose.msra.mxu0 0
  %609 = vmatprep.subr.bf16.mxu0 0
  %610 = vmatpush1.bf16.xpose.msra.mxu0 0
  %611 = vmatprep.subr.bf16.mxu0 0
  %612 = vmatpush1.bf16.xpose.msra.mxu0 0
  %613 = vmatprep.subr.bf16.mxu0 0
  %614 = vmatpush1.bf16.xpose.msra.mxu0 %v599
  %615 = vmatprep.subr.bf16.mxu0 0
  %616 = vmatpush1.bf16.xpose.msra.mxu0 %v596
  %617 = vmatprep.subr.bf16.mxu0 0
  %618 = vmatpush2.bf16.xpose.msra.mxu0 0
  %619 = vmatprep.subr.bf16.mxu0 0
  %620 = vmatpush2.bf16.xpose.msra.mxu0 0
  %621 = vmatprep.subr.bf16.mxu0 0
  %622 = vmatpush2.bf16.xpose.msra.mxu0 0
  %623 = vmatprep.subr.bf16.mxu0 0
  %624 = vmatpush2.bf16.xpose.msra.mxu0 0
  %625 = vmatprep.subr.bf16.mxu0 0
  %626 = vmatpush2.bf16.xpose.msra.mxu0 0
  %627 = vmatprep.subr.bf16.mxu0 0
  %628 = vmatpush2.bf16.xpose.msra.mxu0 0
  %629 = vmatprep.subr.bf16.mxu0 0
  %630 = vmatpush2.bf16.xpose.msra.mxu0 0
  %631 = vmatprep.subr.bf16.mxu0 0
  %632 = vmatpush2.bf16.xpose.msra.mxu0 0
  %633 = vmatprep.mubr.bf16.mxu0 0
  %634 = vmatmul.mubr.bf16.gmra.mxu0 %v590
  %v635 = vpop.f32.mrf.mxu0
  %v636 = vadd.f32 %v224, %v635
  %v637 = vpop.f32.mrf.mxu0
  %v638 = vpop.f32.mrf.mxu0
  %v639 = vadd.f32 %v225, %v638
  %v640 = vpop.f32.mrf.mxu0
  %641 = vmatprep.mubr.bf16.mxu0 0
  %642 = vmatmul.mubr.bf16.gmra.mxu0 %v593
  %v643 = vpop.f32.mrf.mxu0
  %v644 = vadd.f32 %v226, %v643
  %v645 = vpop.f32.mrf.mxu0
  %v646 = vpop.f32.mrf.mxu0
  %v647 = vpop.f32.mrf.mxu0
  %648 = vdwg.mxu0
  %649 = vrot.lane.b32.xlu0 %v514, 112
  %v650 = vpop.permute.xlu0 %649
  %651 = vrot.lane.b32.xlu0 %v515, 112
  %v652 = vpop.permute.xlu0 %651
  %653 = vrot.lane.b32.xlu0 %v514, 80
  %v654 = vpop.permute.xlu0 %653
  %655 = vrot.lane.b32.xlu0 %v515, 80
  %v656 = vpop.permute.xlu0 %655
  %v658 = vsel %vm235, %v650, 0
  %v661 = vsel %vm235, %v652, 0
  %v664 = vsel %vm235, %v654, 0
  %v667 = vsel %vm235, %v656, 0
  %669 = vmatprep.subr.bf16.mxu0 0
  %670 = vmatpush1.bf16.xpose.msra.mxu0 0
  %671 = vmatprep.subr.bf16.mxu0 0
  %672 = vmatpush1.bf16.xpose.msra.mxu0 0
  %673 = vmatprep.subr.bf16.mxu0 0
  %674 = vmatpush1.bf16.xpose.msra.mxu0 0
  %675 = vmatprep.subr.bf16.mxu0 0
  %676 = vmatpush1.bf16.xpose.msra.mxu0 0
  %677 = vmatprep.subr.bf16.mxu0 0
  %678 = vmatpush1.bf16.xpose.msra.mxu0 0
  %679 = vmatprep.subr.bf16.mxu0 0
  %680 = vmatpush1.bf16.xpose.msra.mxu0 0
  %681 = vmatprep.subr.bf16.mxu0 0
  %682 = vmatpush1.bf16.xpose.msra.mxu0 %v667
  %683 = vmatprep.subr.bf16.mxu0 0
  %684 = vmatpush1.bf16.xpose.msra.mxu0 %v664
  %685 = vmatprep.subr.bf16.mxu0 0
  %686 = vmatpush2.bf16.xpose.msra.mxu0 0
  %687 = vmatprep.subr.bf16.mxu0 0
  %688 = vmatpush2.bf16.xpose.msra.mxu0 0
  %689 = vmatprep.subr.bf16.mxu0 0
  %690 = vmatpush2.bf16.xpose.msra.mxu0 0
  %691 = vmatprep.subr.bf16.mxu0 0
  %692 = vmatpush2.bf16.xpose.msra.mxu0 0
  %693 = vmatprep.subr.bf16.mxu0 0
  %694 = vmatpush2.bf16.xpose.msra.mxu0 0
  %695 = vmatprep.subr.bf16.mxu0 0
  %696 = vmatpush2.bf16.xpose.msra.mxu0 0
  %697 = vmatprep.subr.bf16.mxu0 0
  %698 = vmatpush2.bf16.xpose.msra.mxu0 0
  %699 = vmatprep.subr.bf16.mxu0 0
  %700 = vmatpush2.bf16.xpose.msra.mxu0 0
  %701 = vmatprep.mubr.bf16.mxu0 0
  %702 = vmatmul.mubr.bf16.gmra.mxu0 %v658
  %v703 = vpop.f32.mrf.mxu0
  %v704 = vadd.f32 %v224, %v703
  %v705 = vpop.f32.mrf.mxu0
  %v706 = vpop.f32.mrf.mxu0
  %v707 = vadd.f32 %v225, %v706
  %v708 = vpop.f32.mrf.mxu0
  %709 = vmatprep.mubr.bf16.mxu0 0
  %710 = vmatmul.mubr.bf16.gmra.mxu0 %v661
  %v711 = vpop.f32.mrf.mxu0
  %v712 = vadd.f32 %v226, %v711
  %v713 = vpop.f32.mrf.mxu0
  %v714 = vpop.f32.mrf.mxu0
  %v715 = vpop.f32.mrf.mxu0
  %716 = vdwg.mxu0
  %717 = vrot.lane.b32.xlu0 %v514, 104
  %v718 = vpop.permute.xlu0 %717
  %719 = vrot.lane.b32.xlu0 %v515, 104
  %v720 = vpop.permute.xlu0 %719
  %721 = vrot.lane.b32.xlu0 %v514, 72
  %v722 = vpop.permute.xlu0 %721
  %723 = vrot.lane.b32.xlu0 %v515, 72
  %v724 = vpop.permute.xlu0 %723
  %v726 = vsel %vm235, %v718, 0
  %v729 = vsel %vm235, %v720, 0
  %v732 = vsel %vm235, %v722, 0
  %v735 = vsel %vm235, %v724, 0
  %737 = vmatprep.subr.bf16.mxu0 0
  %738 = vmatpush1.bf16.xpose.msra.mxu0 0
  %739 = vmatprep.subr.bf16.mxu0 0
  %740 = vmatpush1.bf16.xpose.msra.mxu0 0
  %741 = vmatprep.subr.bf16.mxu0 0
  %742 = vmatpush1.bf16.xpose.msra.mxu0 0
  %743 = vmatprep.subr.bf16.mxu0 0
  %744 = vmatpush1.bf16.xpose.msra.mxu0 0
  %745 = vmatprep.subr.bf16.mxu0 0
  %746 = vmatpush1.bf16.xpose.msra.mxu0 0
  %747 = vmatprep.subr.bf16.mxu0 0
  %748 = vmatpush1.bf16.xpose.msra.mxu0 0
  %749 = vmatprep.subr.bf16.mxu0 0
  %750 = vmatpush1.bf16.xpose.msra.mxu0 %v735
  %751 = vmatprep.subr.bf16.mxu0 0
  %752 = vmatpush1.bf16.xpose.msra.mxu0 %v732
  %753 = vmatprep.subr.bf16.mxu0 0
  %754 = vmatpush2.bf16.xpose.msra.mxu0 0
  %755 = vmatprep.subr.bf16.mxu0 0
  %756 = vmatpush2.bf16.xpose.msra.mxu0 0
  %757 = vmatprep.subr.bf16.mxu0 0
  %758 = vmatpush2.bf16.xpose.msra.mxu0 0
  %759 = vmatprep.subr.bf16.mxu0 0
  %760 = vmatpush2.bf16.xpose.msra.mxu0 0
  %761 = vmatprep.subr.bf16.mxu0 0
  %762 = vmatpush2.bf16.xpose.msra.mxu0 0
  %763 = vmatprep.subr.bf16.mxu0 0
  %764 = vmatpush2.bf16.xpose.msra.mxu0 0
  %765 = vmatprep.subr.bf16.mxu0 0
  %766 = vmatpush2.bf16.xpose.msra.mxu0 0
  %767 = vmatprep.subr.bf16.mxu0 0
  %768 = vmatpush2.bf16.xpose.msra.mxu0 0
  %769 = vmatprep.mubr.bf16.mxu0 0
  %770 = vmatmul.mubr.bf16.gmra.mxu0 %v726
  %v771 = vpop.f32.mrf.mxu0
  %v772 = vadd.f32 %v224, %v771
  %v773 = vpop.f32.mrf.mxu0
  %v774 = vpop.f32.mrf.mxu0
  %v775 = vadd.f32 %v225, %v774
  %v776 = vpop.f32.mrf.mxu0
  %777 = vmatprep.mubr.bf16.mxu0 0
  %778 = vmatmul.mubr.bf16.gmra.mxu0 %v729
  %v779 = vpop.f32.mrf.mxu0
  %v780 = vadd.f32 %v226, %v779
  %v781 = vpop.f32.mrf.mxu0
  %v782 = vpop.f32.mrf.mxu0
  %v783 = vpop.f32.mrf.mxu0
  %784 = vdwg.mxu0
  %vm785 = vcmask 138240
  %v786 = vsel %vm785, %v283, -inf
  %787 = vmax.xlane.f32.xlu0 %v786
  %v788 = vpop.xlane.xlu0 %787
  %v789 = vsel %vm785, %v286, -inf
  %790 = vmax.xlane.f32.xlu0 %v789
  %v791 = vpop.xlane.xlu0 %790
  %vm792 = vcmask 131072
  %v793 = vsel %vm792, %v291, -inf
  %794 = vmax.xlane.f32.xlu0 %v793
  %v795 = vpop.xlane.xlu0 %794
  %v796 = vsub.f32 %v283, %v788
  %v797 = vsub.f32 %v286, %v791
  %v798 = vsub.f32 %v291, %v795
  %v799 = vmul.f32 %v796, 1.442695
  %v800 = vpow.pop %v799
  %v801 = vmul.f32 %v797, 1.442695
  %v802 = vpow.pop %v801
  %v803 = vmul.f32 %v798, 1.442695
  %v804 = vpow.pop %v803
  %v805 = vsel %vm785, %v800, 0.0
  %806 = vadd.xlane.f32.xlu0 %v805
  %v807 = vpop.xlane.xlu0 %806
  %v808 = vsel %vm785, %v802, 0.0
  %809 = vadd.xlane.f32.xlu0 %v808
  %v810 = vpop.xlane.xlu0 %809
  %v811 = vsel %vm792, %v804, 0.0
  %812 = vadd.xlane.f32.xlu0 %v811
  %v813 = vpop.xlane.xlu0 %812
  %v814 = vrcp.pop %v807
  %v815 = vrcp.pop %v810
  %v816 = vrcp.pop %v813
  %v817 = vmul.f32 %v800, %v814
  %v818 = vmul.f32 %v802, %v815
  %v819 = vmul.f32 %v804, %v816
  %v820 = vsel %vm785, %v351, -inf
  %821 = vmax.xlane.f32.xlu0 %v820
  %v822 = vpop.xlane.xlu0 %821
  %v823 = vsel %vm785, %v354, -inf
  %824 = vmax.xlane.f32.xlu0 %v823
  %v825 = vpop.xlane.xlu0 %824
  %v826 = vsel %vm792, %v359, -inf
  %827 = vmax.xlane.f32.xlu0 %v826
  %v828 = vpop.xlane.xlu0 %827
  %v829 = vsub.f32 %v351, %v822
  %v830 = vsub.f32 %v354, %v825
  %v831 = vsub.f32 %v359, %v828
  %v832 = vmul.f32 %v829, 1.442695
  %v833 = vpow.pop %v832
  %v834 = vmul.f32 %v830, 1.442695
  %v835 = vpow.pop %v834
  %v836 = vmul.f32 %v831, 1.442695
  %v837 = vpow.pop %v836
  %v838 = vsel %vm785, %v833, 0.0
  %839 = vadd.xlane.f32.xlu0 %v838
  %v840 = vpop.xlane.xlu0 %839
  %v841 = vsel %vm785, %v835, 0.0
  %842 = vadd.xlane.f32.xlu0 %v841
  %v843 = vpop.xlane.xlu0 %842
  %v844 = vsel %vm792, %v837, 0.0
  %845 = vadd.xlane.f32.xlu0 %v844
  %v846 = vpop.xlane.xlu0 %845
  %v847 = vrcp.pop %v840
  %v848 = vrcp.pop %v843
  %v849 = vrcp.pop %v846
  %v850 = vmul.f32 %v833, %v847
  %v851 = vmul.f32 %v835, %v848
  %v852 = vmul.f32 %v837, %v849
  %v853 = vsel %vm785, %v419, -inf
  %854 = vmax.xlane.f32.xlu0 %v853
  %v855 = vpop.xlane.xlu0 %854
  %v856 = vsel %vm785, %v422, -inf
  %857 = vmax.xlane.f32.xlu0 %v856
  %v858 = vpop.xlane.xlu0 %857
  %v859 = vsel %vm792, %v427, -inf
  %860 = vmax.xlane.f32.xlu0 %v859
  %v861 = vpop.xlane.xlu0 %860
  %v862 = vsub.f32 %v419, %v855
  %v863 = vsub.f32 %v422, %v858
  %v864 = vsub.f32 %v427, %v861
  %v865 = vmul.f32 %v862, 1.442695
  %v866 = vpow.pop %v865
  %v867 = vmul.f32 %v863, 1.442695
  %v868 = vpow.pop %v867
  %v869 = vmul.f32 %v864, 1.442695
  %v870 = vpow.pop %v869
  %v871 = vsel %vm785, %v866, 0.0
  %872 = vadd.xlane.f32.xlu0 %v871
  %v873 = vpop.xlane.xlu0 %872
  %v874 = vsel %vm785, %v868, 0.0
  %875 = vadd.xlane.f32.xlu0 %v874
  %v876 = vpop.xlane.xlu0 %875
  %v877 = vsel %vm792, %v870, 0.0
  %878 = vadd.xlane.f32.xlu0 %v877
  %v879 = vpop.xlane.xlu0 %878
  %v880 = vrcp.pop %v873
  %v881 = vrcp.pop %v876
  %v882 = vrcp.pop %v879
  %v883 = vmul.f32 %v866, %v880
  %v884 = vmul.f32 %v868, %v881
  %v885 = vmul.f32 %v870, %v882
  %v886 = vsel %vm785, %v487, -inf
  %887 = vmax.xlane.f32.xlu0 %v886
  %v888 = vpop.xlane.xlu0 %887
  %v889 = vsel %vm785, %v490, -inf
  %890 = vmax.xlane.f32.xlu0 %v889
  %v891 = vpop.xlane.xlu0 %890
  %v892 = vsel %vm792, %v495, -inf
  %893 = vmax.xlane.f32.xlu0 %v892
  %v894 = vpop.xlane.xlu0 %893
  %v895 = vsub.f32 %v487, %v888
  %v896 = vsub.f32 %v490, %v891
  %v897 = vsub.f32 %v495, %v894
  %v898 = vmul.f32 %v895, 1.442695
  %v899 = vpow.pop %v898
  %v900 = vmul.f32 %v896, 1.442695
  %v901 = vpow.pop %v900
  %v902 = vmul.f32 %v897, 1.442695
  %v903 = vpow.pop %v902
  %v904 = vsel %vm785, %v899, 0.0
  %905 = vadd.xlane.f32.xlu0 %v904
  %v906 = vpop.xlane.xlu0 %905
  %v907 = vsel %vm785, %v901, 0.0
  %908 = vadd.xlane.f32.xlu0 %v907
  %v909 = vpop.xlane.xlu0 %908
  %v910 = vsel %vm792, %v903, 0.0
  %911 = vadd.xlane.f32.xlu0 %v910
  %v912 = vpop.xlane.xlu0 %911
  %v913 = vrcp.pop %v906
  %v914 = vrcp.pop %v909
  %v915 = vrcp.pop %v912
  %v916 = vmul.f32 %v899, %v913
  %v917 = vmul.f32 %v901, %v914
  %v918 = vmul.f32 %v903, %v915
  %v919 = vsel %vm785, %v568, -inf
  %920 = vmax.xlane.f32.xlu0 %v919
  %v921 = vpop.xlane.xlu0 %920
  %v922 = vsel %vm785, %v571, -inf
  %923 = vmax.xlane.f32.xlu0 %v922
  %v924 = vpop.xlane.xlu0 %923
  %v925 = vsel %vm792, %v576, -inf
  %926 = vmax.xlane.f32.xlu0 %v925
  %v927 = vpop.xlane.xlu0 %926
  %v928 = vsub.f32 %v568, %v921
  %v929 = vsub.f32 %v571, %v924
  %v930 = vsub.f32 %v576, %v927
  %v931 = vmul.f32 %v928, 1.442695
  %v932 = vpow.pop %v931
  %v933 = vmul.f32 %v929, 1.442695
  %v934 = vpow.pop %v933
  %v935 = vmul.f32 %v930, 1.442695
  %v936 = vpow.pop %v935
  %v937 = vsel %vm785, %v932, 0.0
  %938 = vadd.xlane.f32.xlu0 %v937
  %v939 = vpop.xlane.xlu0 %938
  %v940 = vsel %vm785, %v934, 0.0
  %941 = vadd.xlane.f32.xlu0 %v940
  %v942 = vpop.xlane.xlu0 %941
  %v943 = vsel %vm792, %v936, 0.0
  %944 = vadd.xlane.f32.xlu0 %v943
  %v945 = vpop.xlane.xlu0 %944
  %v946 = vrcp.pop %v939
  %v947 = vrcp.pop %v942
  %v948 = vrcp.pop %v945
  %v949 = vmul.f32 %v932, %v946
  %v950 = vmul.f32 %v934, %v947
  %v951 = vmul.f32 %v936, %v948
  %v952 = vsel %vm785, %v636, -inf
  %953 = vmax.xlane.f32.xlu0 %v952
  %v954 = vpop.xlane.xlu0 %953
  %v955 = vsel %vm785, %v639, -inf
  %956 = vmax.xlane.f32.xlu0 %v955
  %v957 = vpop.xlane.xlu0 %956
  %v958 = vsel %vm792, %v644, -inf
  %959 = vmax.xlane.f32.xlu0 %v958
  %v960 = vpop.xlane.xlu0 %959
  %v961 = vsub.f32 %v636, %v954
  %v962 = vsub.f32 %v639, %v957
  %v963 = vsub.f32 %v644, %v960
  %v964 = vmul.f32 %v961, 1.442695
  %v965 = vpow.pop %v964
  %v966 = vmul.f32 %v962, 1.442695
  %v967 = vpow.pop %v966
  %v968 = vmul.f32 %v963, 1.442695
  %v969 = vpow.pop %v968
  %v970 = vsel %vm785, %v965, 0.0
  %971 = vadd.xlane.f32.xlu0 %v970
  %v972 = vpop.xlane.xlu0 %971
  %v973 = vsel %vm785, %v967, 0.0
  %974 = vadd.xlane.f32.xlu0 %v973
  %v975 = vpop.xlane.xlu0 %974
  %v976 = vsel %vm792, %v969, 0.0
  %977 = vadd.xlane.f32.xlu0 %v976
  %v978 = vpop.xlane.xlu0 %977
  %v979 = vrcp.pop %v972
  %v980 = vrcp.pop %v975
  %v981 = vrcp.pop %v978
  %v982 = vmul.f32 %v965, %v979
  %v983 = vmul.f32 %v967, %v980
  %v984 = vmul.f32 %v969, %v981
  %v985 = vsel %vm785, %v704, -inf
  %986 = vmax.xlane.f32.xlu0 %v985
  %v987 = vpop.xlane.xlu0 %986
  %v988 = vsel %vm785, %v707, -inf
  %989 = vmax.xlane.f32.xlu0 %v988
  %v990 = vpop.xlane.xlu0 %989
  %v991 = vsel %vm792, %v712, -inf
  %992 = vmax.xlane.f32.xlu0 %v991
  %v993 = vpop.xlane.xlu0 %992
  %v994 = vsub.f32 %v704, %v987
  %v995 = vsub.f32 %v707, %v990
  %v996 = vsub.f32 %v712, %v993
  %v997 = vmul.f32 %v994, 1.442695
  %v998 = vpow.pop %v997
  %v999 = vmul.f32 %v995, 1.442695
  %v1000 = vpow.pop %v999
  %v1001 = vmul.f32 %v996, 1.442695
  %v1002 = vpow.pop %v1001
  %v1003 = vsel %vm785, %v998, 0.0
  %1004 = vadd.xlane.f32.xlu0 %v1003
  %v1005 = vpop.xlane.xlu0 %1004
  %v1006 = vsel %vm785, %v1000, 0.0
  %1007 = vadd.xlane.f32.xlu0 %v1006
  %v1008 = vpop.xlane.xlu0 %1007
  %v1009 = vsel %vm792, %v1002, 0.0
  %1010 = vadd.xlane.f32.xlu0 %v1009
  %v1011 = vpop.xlane.xlu0 %1010
  %v1012 = vrcp.pop %v1005
  %v1013 = vrcp.pop %v1008
  %v1014 = vrcp.pop %v1011
  %v1015 = vmul.f32 %v998, %v1012
  %v1016 = vmul.f32 %v1000, %v1013
  %v1017 = vmul.f32 %v1002, %v1014
  %v1018 = vsel %vm785, %v772, -inf
  %1019 = vmax.xlane.f32.xlu0 %v1018
  %v1020 = vpop.xlane.xlu0 %1019
  %v1021 = vsel %vm785, %v775, -inf
  %1022 = vmax.xlane.f32.xlu0 %v1021
  %v1023 = vpop.xlane.xlu0 %1022
  %v1024 = vsel %vm792, %v780, -inf
  %1025 = vmax.xlane.f32.xlu0 %v1024
  %v1026 = vpop.xlane.xlu0 %1025
  %v1027 = vsub.f32 %v772, %v1020
  %v1028 = vsub.f32 %v775, %v1023
  %v1029 = vsub.f32 %v780, %v1026
  %v1030 = vmul.f32 %v1027, 1.442695
  %v1031 = vpow.pop %v1030
  %v1032 = vmul.f32 %v1028, 1.442695
  %v1033 = vpow.pop %v1032
  %v1034 = vmul.f32 %v1029, 1.442695
  %v1035 = vpow.pop %v1034
  %v1036 = vsel %vm785, %v1031, 0.0
  %1037 = vadd.xlane.f32.xlu0 %v1036
  %v1038 = vpop.xlane.xlu0 %1037
  %v1039 = vsel %vm785, %v1033, 0.0
  %1040 = vadd.xlane.f32.xlu0 %v1039
  %v1041 = vpop.xlane.xlu0 %1040
  %v1042 = vsel %vm792, %v1035, 0.0
  %1043 = vadd.xlane.f32.xlu0 %v1042
  %v1044 = vpop.xlane.xlu0 %1043
  %v1045 = vrcp.pop %v1038
  %v1046 = vrcp.pop %v1041
  %v1047 = vrcp.pop %v1044
  %v1048 = vmul.f32 %v1031, %v1045
  %v1049 = vmul.f32 %v1033, %v1046
  %v1050 = vmul.f32 %v1035, %v1047
  %v1051 = vpack.c.bf16 %v818, %v817
  %v1052 = vpack.c.bf16 %v819, %v819
  %1053 = vrot.lane.b32.xlu0 %v227, 64
  %v1054 = vpop.permute.xlu0 %1053
  %1055 = vrot.lane.b32.xlu0 %v228, 64
  %v1056 = vpop.permute.xlu0 %1055
  %v1059 = vsel %vm785, %v1051, 0
  %v1062 = vsel %vm785, %v1052, 0
  %v1064 = vsel 0, 4294967295, 65535
  %v1065 = vsel %vm64, %v1064, 0
  %v1067 = vand.u32 %v1056, %v1065
  %1069 = vmatprep.subr.bf16.mxu0 0
  %1070 = vmatpush1.bf16.msra.mxu0 0
  %1071 = vmatprep.subr.bf16.mxu0 0
  %1072 = vmatpush1.bf16.msra.mxu0 0
  %1073 = vmatprep.subr.bf16.mxu0 0
  %1074 = vmatpush1.bf16.msra.mxu0 0
  %1075 = vmatprep.subr.bf16.mxu0 0
  %1076 = vmatpush1.bf16.msra.mxu0 0
  %1077 = vmatprep.subr.bf16.mxu0 0
  %1078 = vmatpush1.bf16.msra.mxu0 0
  %1079 = vmatprep.subr.bf16.mxu0 0
  %1080 = vmatpush1.bf16.msra.mxu0 0
  %1081 = vmatprep.subr.bf16.mxu0 0
  %1082 = vmatpush1.bf16.msra.mxu0 %v1067
  %1083 = vmatprep.subr.bf16.mxu0 0
  %1084 = vmatpush1.bf16.msra.mxu0 %v1054
  %1085 = vmatprep.subr.bf16.mxu0 0
  %1086 = vmatpush2.bf16.msra.mxu0 0
  %1087 = vmatprep.subr.bf16.mxu0 0
  %1088 = vmatpush2.bf16.msra.mxu0 0
  %1089 = vmatprep.subr.bf16.mxu0 0
  %1090 = vmatpush2.bf16.msra.mxu0 0
  %1091 = vmatprep.subr.bf16.mxu0 0
  %1092 = vmatpush2.bf16.msra.mxu0 0
  %1093 = vmatprep.subr.bf16.mxu0 0
  %1094 = vmatpush2.bf16.msra.mxu0 0
  %1095 = vmatprep.subr.bf16.mxu0 0
  %1096 = vmatpush2.bf16.msra.mxu0 0
  %1097 = vmatprep.subr.bf16.mxu0 0
  %1098 = vmatpush2.bf16.msra.mxu0 0
  %1099 = vmatprep.subr.bf16.mxu0 0
  %1100 = vmatpush2.bf16.msra.mxu0 0
  %1101 = vmatprep.mubr.bf16.mxu0 0
  %1102 = vmatmul.mubr.bf16.gmra.mxu0 %v1059
  %v1103 = vpop.f32.mrf.mxu0
  %v1104 = vadd.f32 0.0, %v1103
  %v1105 = vpop.f32.mrf.mxu0
  %v1106 = vpop.f32.mrf.mxu0
  %v1107 = vadd.f32 0.0, %v1106
  %v1108 = vpop.f32.mrf.mxu0
  %1109 = vmatprep.mubr.bf16.mxu0 0
  %1110 = vmatmul.mubr.bf16.gmra.mxu0 %v1062
  %v1111 = vpop.f32.mrf.mxu0
  %v1112 = vadd.f32 0.0, %v1111
  %v1113 = vpop.f32.mrf.mxu0
  %v1114 = vpop.f32.mrf.mxu0
  %v1115 = vpop.f32.mrf.mxu0
  %1116 = vdwg.mxu0
  %v1117 = vpack.c.bf16 %v851, %v850
  %v1118 = vpack.c.bf16 %v852, %v852
  %1119 = vrot.lane.b32.xlu0 %v227, 56
  %v1120 = vpop.permute.xlu0 %1119
  %1121 = vrot.lane.b32.xlu0 %v228, 56
  %v1122 = vpop.permute.xlu0 %1121
  %v1125 = vsel %vm785, %v1117, 0
  %v1128 = vsel %vm785, %v1118, 0
  %v1131 = vand.u32 %v1122, %v1065
  %1133 = vmatprep.subr.bf16.mxu0 0
  %1134 = vmatpush1.bf16.msra.mxu0 0
  %1135 = vmatprep.subr.bf16.mxu0 0
  %1136 = vmatpush1.bf16.msra.mxu0 0
  %1137 = vmatprep.subr.bf16.mxu0 0
  %1138 = vmatpush1.bf16.msra.mxu0 0
  %1139 = vmatprep.subr.bf16.mxu0 0
  %1140 = vmatpush1.bf16.msra.mxu0 0
  %1141 = vmatprep.subr.bf16.mxu0 0
  %1142 = vmatpush1.bf16.msra.mxu0 0
  %1143 = vmatprep.subr.bf16.mxu0 0
  %1144 = vmatpush1.bf16.msra.mxu0 0
  %1145 = vmatprep.subr.bf16.mxu0 0
  %1146 = vmatpush1.bf16.msra.mxu0 %v1131
  %1147 = vmatprep.subr.bf16.mxu0 0
  %1148 = vmatpush1.bf16.msra.mxu0 %v1120
  %1149 = vmatprep.subr.bf16.mxu0 0
  %1150 = vmatpush2.bf16.msra.mxu0 0
  %1151 = vmatprep.subr.bf16.mxu0 0
  %1152 = vmatpush2.bf16.msra.mxu0 0
  %1153 = vmatprep.subr.bf16.mxu0 0
  %1154 = vmatpush2.bf16.msra.mxu0 0
  %1155 = vmatprep.subr.bf16.mxu0 0
  %1156 = vmatpush2.bf16.msra.mxu0 0
  %1157 = vmatprep.subr.bf16.mxu0 0
  %1158 = vmatpush2.bf16.msra.mxu0 0
  %1159 = vmatprep.subr.bf16.mxu0 0
  %1160 = vmatpush2.bf16.msra.mxu0 0
  %1161 = vmatprep.subr.bf16.mxu0 0
  %1162 = vmatpush2.bf16.msra.mxu0 0
  %1163 = vmatprep.subr.bf16.mxu0 0
  %1164 = vmatpush2.bf16.msra.mxu0 0
  %1165 = vmatprep.mubr.bf16.mxu0 0
  %1166 = vmatmul.mubr.bf16.gmra.mxu0 %v1125
  %v1167 = vpop.f32.mrf.mxu0
  %v1168 = vadd.f32 0.0, %v1167
  %v1169 = vpop.f32.mrf.mxu0
  %v1170 = vpop.f32.mrf.mxu0
  %v1171 = vadd.f32 0.0, %v1170
  %v1172 = vpop.f32.mrf.mxu0
  %1173 = vmatprep.mubr.bf16.mxu0 0
  %1174 = vmatmul.mubr.bf16.gmra.mxu0 %v1128
  %v1175 = vpop.f32.mrf.mxu0
  %v1176 = vadd.f32 0.0, %v1175
  %v1177 = vpop.f32.mrf.mxu0
  %v1178 = vpop.f32.mrf.mxu0
  %v1179 = vpop.f32.mrf.mxu0
  %1180 = vdwg.mxu0
  %v1181 = vpack.c.bf16 %v884, %v883
  %v1182 = vpack.c.bf16 %v885, %v885
  %1183 = vrot.lane.b32.xlu0 %v227, 48
  %v1184 = vpop.permute.xlu0 %1183
  %1185 = vrot.lane.b32.xlu0 %v228, 48
  %v1186 = vpop.permute.xlu0 %1185
  %v1189 = vsel %vm785, %v1181, 0
  %v1192 = vsel %vm785, %v1182, 0
  %v1195 = vand.u32 %v1186, %v1065
  %1197 = vmatprep.subr.bf16.mxu0 0
  %1198 = vmatpush1.bf16.msra.mxu0 0
  %1199 = vmatprep.subr.bf16.mxu0 0
  %1200 = vmatpush1.bf16.msra.mxu0 0
  %1201 = vmatprep.subr.bf16.mxu0 0
  %1202 = vmatpush1.bf16.msra.mxu0 0
  %1203 = vmatprep.subr.bf16.mxu0 0
  %1204 = vmatpush1.bf16.msra.mxu0 0
  %1205 = vmatprep.subr.bf16.mxu0 0
  %1206 = vmatpush1.bf16.msra.mxu0 0
  %1207 = vmatprep.subr.bf16.mxu0 0
  %1208 = vmatpush1.bf16.msra.mxu0 0
  %1209 = vmatprep.subr.bf16.mxu0 0
  %1210 = vmatpush1.bf16.msra.mxu0 %v1195
  %1211 = vmatprep.subr.bf16.mxu0 0
  %1212 = vmatpush1.bf16.msra.mxu0 %v1184
  %1213 = vmatprep.subr.bf16.mxu0 0
  %1214 = vmatpush2.bf16.msra.mxu0 0
  %1215 = vmatprep.subr.bf16.mxu0 0
  %1216 = vmatpush2.bf16.msra.mxu0 0
  %1217 = vmatprep.subr.bf16.mxu0 0
  %1218 = vmatpush2.bf16.msra.mxu0 0
  %1219 = vmatprep.subr.bf16.mxu0 0
  %1220 = vmatpush2.bf16.msra.mxu0 0
  %1221 = vmatprep.subr.bf16.mxu0 0
  %1222 = vmatpush2.bf16.msra.mxu0 0
  %1223 = vmatprep.subr.bf16.mxu0 0
  %1224 = vmatpush2.bf16.msra.mxu0 0
  %1225 = vmatprep.subr.bf16.mxu0 0
  %1226 = vmatpush2.bf16.msra.mxu0 0
  %1227 = vmatprep.subr.bf16.mxu0 0
  %1228 = vmatpush2.bf16.msra.mxu0 0
  %1229 = vmatprep.mubr.bf16.mxu0 0
  %1230 = vmatmul.mubr.bf16.gmra.mxu0 %v1189
  %v1231 = vpop.f32.mrf.mxu0
  %v1232 = vadd.f32 0.0, %v1231
  %v1233 = vpop.f32.mrf.mxu0
  %v1234 = vpop.f32.mrf.mxu0
  %v1235 = vadd.f32 0.0, %v1234
  %v1236 = vpop.f32.mrf.mxu0
  %1237 = vmatprep.mubr.bf16.mxu0 0
  %1238 = vmatmul.mubr.bf16.gmra.mxu0 %v1192
  %v1239 = vpop.f32.mrf.mxu0
  %v1240 = vadd.f32 0.0, %v1239
  %v1241 = vpop.f32.mrf.mxu0
  %v1242 = vpop.f32.mrf.mxu0
  %v1243 = vpop.f32.mrf.mxu0
  %1244 = vdwg.mxu0
  %v1245 = vpack.c.bf16 %v917, %v916
  %v1246 = vpack.c.bf16 %v918, %v918
  %1247 = vrot.lane.b32.xlu0 %v227, 40
  %v1248 = vpop.permute.xlu0 %1247
  %1249 = vrot.lane.b32.xlu0 %v228, 40
  %v1250 = vpop.permute.xlu0 %1249
  %v1253 = vsel %vm785, %v1245, 0
  %v1256 = vsel %vm785, %v1246, 0
  %v1259 = vand.u32 %v1250, %v1065
  %1261 = vmatprep.subr.bf16.mxu0 0
  %1262 = vmatpush1.bf16.msra.mxu0 0
  %1263 = vmatprep.subr.bf16.mxu0 0
  %1264 = vmatpush1.bf16.msra.mxu0 0
  %1265 = vmatprep.subr.bf16.mxu0 0
  %1266 = vmatpush1.bf16.msra.mxu0 0
  %1267 = vmatprep.subr.bf16.mxu0 0
  %1268 = vmatpush1.bf16.msra.mxu0 0
  %1269 = vmatprep.subr.bf16.mxu0 0
  %1270 = vmatpush1.bf16.msra.mxu0 0
  %1271 = vmatprep.subr.bf16.mxu0 0
  %1272 = vmatpush1.bf16.msra.mxu0 0
  %1273 = vmatprep.subr.bf16.mxu0 0
  %1274 = vmatpush1.bf16.msra.mxu0 %v1259
  %1275 = vmatprep.subr.bf16.mxu0 0
  %1276 = vmatpush1.bf16.msra.mxu0 %v1248
  %1277 = vmatprep.subr.bf16.mxu0 0
  %1278 = vmatpush2.bf16.msra.mxu0 0
  %1279 = vmatprep.subr.bf16.mxu0 0
  %1280 = vmatpush2.bf16.msra.mxu0 0
  %1281 = vmatprep.subr.bf16.mxu0 0
  %1282 = vmatpush2.bf16.msra.mxu0 0
  %1283 = vmatprep.subr.bf16.mxu0 0
  %1284 = vmatpush2.bf16.msra.mxu0 0
  %1285 = vmatprep.subr.bf16.mxu0 0
  %1286 = vmatpush2.bf16.msra.mxu0 0
  %1287 = vmatprep.subr.bf16.mxu0 0
  %1288 = vmatpush2.bf16.msra.mxu0 0
  %1289 = vmatprep.subr.bf16.mxu0 0
  %1290 = vmatpush2.bf16.msra.mxu0 0
  %1291 = vmatprep.subr.bf16.mxu0 0
  %1292 = vmatpush2.bf16.msra.mxu0 0
  %1293 = vmatprep.mubr.bf16.mxu0 0
  %1294 = vmatmul.mubr.bf16.gmra.mxu0 %v1253
  %v1295 = vpop.f32.mrf.mxu0
  %v1296 = vadd.f32 0.0, %v1295
  %v1297 = vpop.f32.mrf.mxu0
  %v1298 = vpop.f32.mrf.mxu0
  %v1299 = vadd.f32 0.0, %v1298
  %v1300 = vpop.f32.mrf.mxu0
  %1301 = vmatprep.mubr.bf16.mxu0 0
  %1302 = vmatmul.mubr.bf16.gmra.mxu0 %v1256
  %v1303 = vpop.f32.mrf.mxu0
  %v1304 = vadd.f32 0.0, %v1303
  %v1305 = vpop.f32.mrf.mxu0
  %v1306 = vpop.f32.mrf.mxu0
  %v1307 = vpop.f32.mrf.mxu0
  %1308 = vdwg.mxu0
  %v1309 = vpack.c.bf16 %v950, %v949
  %v1310 = vpack.c.bf16 %v951, %v951
  %1311 = vrot.lane.b32.xlu0 %v514, 64
  %v1312 = vpop.permute.xlu0 %1311
  %1313 = vrot.lane.b32.xlu0 %v515, 64
  %v1314 = vpop.permute.xlu0 %1313
  %v1317 = vsel %vm785, %v1309, 0
  %v1320 = vsel %vm785, %v1310, 0
  %v1323 = vand.u32 %v1314, %v1065
  %1325 = vmatprep.subr.bf16.mxu0 0
  %1326 = vmatpush1.bf16.msra.mxu0 0
  %1327 = vmatprep.subr.bf16.mxu0 0
  %1328 = vmatpush1.bf16.msra.mxu0 0
  %1329 = vmatprep.subr.bf16.mxu0 0
  %1330 = vmatpush1.bf16.msra.mxu0 0
  %1331 = vmatprep.subr.bf16.mxu0 0
  %1332 = vmatpush1.bf16.msra.mxu0 0
  %1333 = vmatprep.subr.bf16.mxu0 0
  %1334 = vmatpush1.bf16.msra.mxu0 0
  %1335 = vmatprep.subr.bf16.mxu0 0
  %1336 = vmatpush1.bf16.msra.mxu0 0
  %1337 = vmatprep.subr.bf16.mxu0 0
  %1338 = vmatpush1.bf16.msra.mxu0 %v1323
  %1339 = vmatprep.subr.bf16.mxu0 0
  %1340 = vmatpush1.bf16.msra.mxu0 %v1312
  %1341 = vmatprep.subr.bf16.mxu0 0
  %1342 = vmatpush2.bf16.msra.mxu0 0
  %1343 = vmatprep.subr.bf16.mxu0 0
  %1344 = vmatpush2.bf16.msra.mxu0 0
  %1345 = vmatprep.subr.bf16.mxu0 0
  %1346 = vmatpush2.bf16.msra.mxu0 0
  %1347 = vmatprep.subr.bf16.mxu0 0
  %1348 = vmatpush2.bf16.msra.mxu0 0
  %1349 = vmatprep.subr.bf16.mxu0 0
  %1350 = vmatpush2.bf16.msra.mxu0 0
  %1351 = vmatprep.subr.bf16.mxu0 0
  %1352 = vmatpush2.bf16.msra.mxu0 0
  %1353 = vmatprep.subr.bf16.mxu0 0
  %1354 = vmatpush2.bf16.msra.mxu0 0
  %1355 = vmatprep.subr.bf16.mxu0 0
  %1356 = vmatpush2.bf16.msra.mxu0 0
  %1357 = vmatprep.mubr.bf16.mxu0 0
  %1358 = vmatmul.mubr.bf16.gmra.mxu0 %v1317
  %v1359 = vpop.f32.mrf.mxu0
  %v1360 = vadd.f32 0.0, %v1359
  %v1361 = vpop.f32.mrf.mxu0
  %v1362 = vpop.f32.mrf.mxu0
  %v1363 = vadd.f32 0.0, %v1362
  %v1364 = vpop.f32.mrf.mxu0
  %1365 = vmatprep.mubr.bf16.mxu0 0
  %1366 = vmatmul.mubr.bf16.gmra.mxu0 %v1320
  %v1367 = vpop.f32.mrf.mxu0
  %v1368 = vadd.f32 0.0, %v1367
  %v1369 = vpop.f32.mrf.mxu0
  %v1370 = vpop.f32.mrf.mxu0
  %v1371 = vpop.f32.mrf.mxu0
  %1372 = vdwg.mxu0
  %v1373 = vpack.c.bf16 %v983, %v982
  %v1374 = vpack.c.bf16 %v984, %v984
  %1375 = vrot.lane.b32.xlu0 %v514, 56
  %v1376 = vpop.permute.xlu0 %1375
  %1377 = vrot.lane.b32.xlu0 %v515, 56
  %v1378 = vpop.permute.xlu0 %1377
  %v1381 = vsel %vm785, %v1373, 0
  %v1384 = vsel %vm785, %v1374, 0
  %v1387 = vand.u32 %v1378, %v1065
  %1389 = vmatprep.subr.bf16.mxu0 0
  %1390 = vmatpush1.bf16.msra.mxu0 0
  %1391 = vmatprep.subr.bf16.mxu0 0
  %1392 = vmatpush1.bf16.msra.mxu0 0
  %1393 = vmatprep.subr.bf16.mxu0 0
  %1394 = vmatpush1.bf16.msra.mxu0 0
  %1395 = vmatprep.subr.bf16.mxu0 0
  %1396 = vmatpush1.bf16.msra.mxu0 0
  %1397 = vmatprep.subr.bf16.mxu0 0
  %1398 = vmatpush1.bf16.msra.mxu0 0
  %1399 = vmatprep.subr.bf16.mxu0 0
  %1400 = vmatpush1.bf16.msra.mxu0 0
  %1401 = vmatprep.subr.bf16.mxu0 0
  %1402 = vmatpush1.bf16.msra.mxu0 %v1387
  %1403 = vmatprep.subr.bf16.mxu0 0
  %1404 = vmatpush1.bf16.msra.mxu0 %v1376
  %1405 = vmatprep.subr.bf16.mxu0 0
  %1406 = vmatpush2.bf16.msra.mxu0 0
  %1407 = vmatprep.subr.bf16.mxu0 0
  %1408 = vmatpush2.bf16.msra.mxu0 0
  %1409 = vmatprep.subr.bf16.mxu0 0
  %1410 = vmatpush2.bf16.msra.mxu0 0
  %1411 = vmatprep.subr.bf16.mxu0 0
  %1412 = vmatpush2.bf16.msra.mxu0 0
  %1413 = vmatprep.subr.bf16.mxu0 0
  %1414 = vmatpush2.bf16.msra.mxu0 0
  %1415 = vmatprep.subr.bf16.mxu0 0
  %1416 = vmatpush2.bf16.msra.mxu0 0
  %1417 = vmatprep.subr.bf16.mxu0 0
  %1418 = vmatpush2.bf16.msra.mxu0 0
  %1419 = vmatprep.subr.bf16.mxu0 0
  %1420 = vmatpush2.bf16.msra.mxu0 0
  %1421 = vmatprep.mubr.bf16.mxu0 0
  %1422 = vmatmul.mubr.bf16.gmra.mxu0 %v1381
  %v1423 = vpop.f32.mrf.mxu0
  %v1424 = vadd.f32 0.0, %v1423
  %v1425 = vpop.f32.mrf.mxu0
  %v1426 = vpop.f32.mrf.mxu0
  %v1427 = vadd.f32 0.0, %v1426
  %v1428 = vpop.f32.mrf.mxu0
  %1429 = vmatprep.mubr.bf16.mxu0 0
  %1430 = vmatmul.mubr.bf16.gmra.mxu0 %v1384
  %v1431 = vpop.f32.mrf.mxu0
  %v1432 = vadd.f32 0.0, %v1431
  %v1433 = vpop.f32.mrf.mxu0
  %v1434 = vpop.f32.mrf.mxu0
  %v1435 = vpop.f32.mrf.mxu0
  %1436 = vdwg.mxu0
  %v1437 = vpack.c.bf16 %v1016, %v1015
  %v1438 = vpack.c.bf16 %v1017, %v1017
  %1439 = vrot.lane.b32.xlu0 %v514, 48
  %v1440 = vpop.permute.xlu0 %1439
  %1441 = vrot.lane.b32.xlu0 %v515, 48
  %v1442 = vpop.permute.xlu0 %1441
  %v1445 = vsel %vm785, %v1437, 0
  %v1448 = vsel %vm785, %v1438, 0
  %v1451 = vand.u32 %v1442, %v1065
  %1453 = vmatprep.subr.bf16.mxu0 0
  %1454 = vmatpush1.bf16.msra.mxu0 0
  %1455 = vmatprep.subr.bf16.mxu0 0
  %1456 = vmatpush1.bf16.msra.mxu0 0
  %1457 = vmatprep.subr.bf16.mxu0 0
  %1458 = vmatpush1.bf16.msra.mxu0 0
  %1459 = vmatprep.subr.bf16.mxu0 0
  %1460 = vmatpush1.bf16.msra.mxu0 0
  %1461 = vmatprep.subr.bf16.mxu0 0
  %1462 = vmatpush1.bf16.msra.mxu0 0
  %1463 = vmatprep.subr.bf16.mxu0 0
  %1464 = vmatpush1.bf16.msra.mxu0 0
  %1465 = vmatprep.subr.bf16.mxu0 0
  %1466 = vmatpush1.bf16.msra.mxu0 %v1451
  %1467 = vmatprep.subr.bf16.mxu0 0
  %1468 = vmatpush1.bf16.msra.mxu0 %v1440
  %1469 = vmatprep.subr.bf16.mxu0 0
  %1470 = vmatpush2.bf16.msra.mxu0 0
  %1471 = vmatprep.subr.bf16.mxu0 0
  %1472 = vmatpush2.bf16.msra.mxu0 0
  %1473 = vmatprep.subr.bf16.mxu0 0
  %1474 = vmatpush2.bf16.msra.mxu0 0
  %1475 = vmatprep.subr.bf16.mxu0 0
  %1476 = vmatpush2.bf16.msra.mxu0 0
  %1477 = vmatprep.subr.bf16.mxu0 0
  %1478 = vmatpush2.bf16.msra.mxu0 0
  %1479 = vmatprep.subr.bf16.mxu0 0
  %1480 = vmatpush2.bf16.msra.mxu0 0
  %1481 = vmatprep.subr.bf16.mxu0 0
  %1482 = vmatpush2.bf16.msra.mxu0 0
  %1483 = vmatprep.subr.bf16.mxu0 0
  %1484 = vmatpush2.bf16.msra.mxu0 0
  %1485 = vmatprep.mubr.bf16.mxu0 0
  %1486 = vmatmul.mubr.bf16.gmra.mxu0 %v1445
  %v1487 = vpop.f32.mrf.mxu0
  %v1488 = vadd.f32 0.0, %v1487
  %v1489 = vpop.f32.mrf.mxu0
  %v1490 = vpop.f32.mrf.mxu0
  %v1491 = vadd.f32 0.0, %v1490
  %v1492 = vpop.f32.mrf.mxu0
  %1493 = vmatprep.mubr.bf16.mxu0 0
  %1494 = vmatmul.mubr.bf16.gmra.mxu0 %v1448
  %v1495 = vpop.f32.mrf.mxu0
  %v1496 = vadd.f32 0.0, %v1495
  %v1497 = vpop.f32.mrf.mxu0
  %v1498 = vpop.f32.mrf.mxu0
  %v1499 = vpop.f32.mrf.mxu0
  %1500 = vdwg.mxu0
  %v1501 = vpack.c.bf16 %v1049, %v1048
  %v1502 = vpack.c.bf16 %v1050, %v1050
  %1503 = vrot.lane.b32.xlu0 %v514, 40
  %v1504 = vpop.permute.xlu0 %1503
  %1505 = vrot.lane.b32.xlu0 %v515, 40
  %v1506 = vpop.permute.xlu0 %1505
  %v1509 = vsel %vm785, %v1501, 0
  %v1512 = vsel %vm785, %v1502, 0
  %v1515 = vand.u32 %v1506, %v1065
  %1517 = vmatprep.subr.bf16.mxu0 0
  %1518 = vmatpush1.bf16.msra.mxu0 0
  %1519 = vmatprep.subr.bf16.mxu0 0
  %1520 = vmatpush1.bf16.msra.mxu0 0
  %1521 = vmatprep.subr.bf16.mxu0 0
  %1522 = vmatpush1.bf16.msra.mxu0 0
  %1523 = vmatprep.subr.bf16.mxu0 0
  %1524 = vmatpush1.bf16.msra.mxu0 0
  %1525 = vmatprep.subr.bf16.mxu0 0
  %1526 = vmatpush1.bf16.msra.mxu0 0
  %1527 = vmatprep.subr.bf16.mxu0 0
  %1528 = vmatpush1.bf16.msra.mxu0 0
  %1529 = vmatprep.subr.bf16.mxu0 0
  %1530 = vmatpush1.bf16.msra.mxu0 %v1515
  %1531 = vmatprep.subr.bf16.mxu0 0
  %1532 = vmatpush1.bf16.msra.mxu0 %v1504
  %1533 = vmatprep.subr.bf16.mxu0 0
  %1534 = vmatpush2.bf16.msra.mxu0 0
  %1535 = vmatprep.subr.bf16.mxu0 0
  %1536 = vmatpush2.bf16.msra.mxu0 0
  %1537 = vmatprep.subr.bf16.mxu0 0
  %1538 = vmatpush2.bf16.msra.mxu0 0
  %1539 = vmatprep.subr.bf16.mxu0 0
  %1540 = vmatpush2.bf16.msra.mxu0 0
  %1541 = vmatprep.subr.bf16.mxu0 0
  %1542 = vmatpush2.bf16.msra.mxu0 0
  %1543 = vmatprep.subr.bf16.mxu0 0
  %1544 = vmatpush2.bf16.msra.mxu0 0
  %1545 = vmatprep.subr.bf16.mxu0 0
  %1546 = vmatpush2.bf16.msra.mxu0 0
  %1547 = vmatprep.subr.bf16.mxu0 0
  %1548 = vmatpush2.bf16.msra.mxu0 0
  %1549 = vmatprep.mubr.bf16.mxu0 0
  %1550 = vmatmul.mubr.bf16.gmra.mxu0 %v1509
  %v1551 = vpop.f32.mrf.mxu0
  %v1552 = vadd.f32 0.0, %v1551
  %v1553 = vpop.f32.mrf.mxu0
  %v1554 = vpop.f32.mrf.mxu0
  %v1555 = vadd.f32 0.0, %v1554
  %v1556 = vpop.f32.mrf.mxu0
  %1557 = vmatprep.mubr.bf16.mxu0 0
  %1558 = vmatmul.mubr.bf16.gmra.mxu0 %v1512
  %v1559 = vpop.f32.mrf.mxu0
  %v1560 = vadd.f32 0.0, %v1559
  %v1561 = vpop.f32.mrf.mxu0
  %v1562 = vpop.f32.mrf.mxu0
  %v1563 = vpop.f32.mrf.mxu0
  %1564 = vdwg.mxu0
  %1568 = vrot.lane.b32.xlu0 %v1168, 8
  %v1569 = vpop.permute.xlu0 %1568
  %1570 = vrot.lane.b32.xlu0 %v1171, 8
  %v1571 = vpop.permute.xlu0 %1570
  %1572 = vrot.lane.b32.xlu0 %v1176, 8
  %v1573 = vpop.permute.xlu0 %1572
  %1580 = vrot.lane.b32.xlu0 %v1232, 16
  %v1581 = vpop.permute.xlu0 %1580
  %1582 = vrot.lane.b32.xlu0 %v1235, 16
  %v1583 = vpop.permute.xlu0 %1582
  %1584 = vrot.lane.b32.xlu0 %v1240, 16
  %v1585 = vpop.permute.xlu0 %1584
  %1592 = vrot.lane.b32.xlu0 %v1296, 24
  %v1593 = vpop.permute.xlu0 %1592
  %1594 = vrot.lane.b32.xlu0 %v1299, 24
  %v1595 = vpop.permute.xlu0 %1594
  %1596 = vrot.lane.b32.xlu0 %v1304, 24
  %v1597 = vpop.permute.xlu0 %1596
  %v1601 = vsel %vm235, %v1104, %v1569
  %v1602 = vsel %vm235, %v1107, %v1571
  %v1603 = vsel %vm235, %v1112, %v1573
  %vm1604 = vcmask 130048
  %v1605 = vsel %vm1604, %v1601, %v1581
  %v1606 = vsel %vm1604, %v1602, %v1583
  %v1607 = vsel %vm1604, %v1603, %v1585
  %vm1608 = vcmask 195584
  %v1609 = vsel %vm1608, %v1605, %v1593
  %v1610 = vsel %vm1608, %v1606, %v1595
  %v1611 = vsel %vm1608, %v1607, %v1597
  %1615 = vrot.lane.b32.xlu0 %v1424, 8
  %v1616 = vpop.permute.xlu0 %1615
  %1617 = vrot.lane.b32.xlu0 %v1427, 8
  %v1618 = vpop.permute.xlu0 %1617
  %1619 = vrot.lane.b32.xlu0 %v1432, 8
  %v1620 = vpop.permute.xlu0 %1619
  %1627 = vrot.lane.b32.xlu0 %v1488, 16
  %v1628 = vpop.permute.xlu0 %1627
  %1629 = vrot.lane.b32.xlu0 %v1491, 16
  %v1630 = vpop.permute.xlu0 %1629
  %1631 = vrot.lane.b32.xlu0 %v1496, 16
  %v1632 = vpop.permute.xlu0 %1631
  %1639 = vrot.lane.b32.xlu0 %v1552, 24
  %v1640 = vpop.permute.xlu0 %1639
  %1641 = vrot.lane.b32.xlu0 %v1555, 24
  %v1642 = vpop.permute.xlu0 %1641
  %1643 = vrot.lane.b32.xlu0 %v1560, 24
  %v1644 = vpop.permute.xlu0 %1643
  %v1648 = vsel %vm235, %v1360, %v1616
  %v1649 = vsel %vm235, %v1363, %v1618
  %v1650 = vsel %vm235, %v1368, %v1620
  %v1651 = vsel %vm1604, %v1648, %v1628
  %v1652 = vsel %vm1604, %v1649, %v1630
  %v1653 = vsel %vm1604, %v1650, %v1632
  %v1654 = vsel %vm1608, %v1651, %v1640
  %v1655 = vsel %vm1608, %v1652, %v1642
  %v1656 = vsel %vm1608, %v1653, %v1644
  %v1660 = vrot.slane %v1654, 7
  %v1661 = vrot.slane %v1655, 7
  %v1662 = vsel %vm64, %v1660, %v1661
  %v1663 = vrot.slane %v1656, 7
  %v1664 = vsel %vm64, %v1661, %v1663
  %v1668 = vsel %vm64, %v1611, %v1660
  %v1669 = vpack.c.bf16 %v1610, %v1609
  %v1670 = vpack.c.bf16 %v1662, %v1668
  %v1671 = vpack.c.bf16 %v1664, %v1664
  %v1672 = vpack.c.bf16 %v20, %v19
  %v1673 = vpack.c.bf16 %v22, %v21
  %v1675 = vsel %vm149, %v1669, 0
  %v1678 = vsel %vm149, %v1670, 0
  %v1681 = vsel %vm149, %v1671, 0
  %1683 = vmatprep.subr.bf16.mxu0 0
  %1684 = vmatpush1.bf16.msra.mxu0 0
  %1685 = vmatprep.subr.bf16.mxu0 0
  %1686 = vmatpush1.bf16.msra.mxu0 0
  %1687 = vmatprep.subr.bf16.mxu0 0
  %1688 = vmatpush1.bf16.msra.mxu0 0
  %1689 = vmatprep.subr.bf16.mxu0 0
  %1690 = vmatpush1.bf16.msra.mxu0 0
  %1691 = vmatprep.subr.bf16.mxu0 0
  %1692 = vmatpush1.bf16.msra.mxu0 0
  %1693 = vmatprep.subr.bf16.mxu0 0
  %1694 = vmatpush1.bf16.msra.mxu0 0
  %1695 = vmatprep.subr.bf16.mxu0 0
  %1696 = vmatpush1.bf16.msra.mxu0 %v1673
  %1697 = vmatprep.subr.bf16.mxu0 0
  %1698 = vmatpush1.bf16.msra.mxu0 %v1672
  %1699 = vmatprep.subr.bf16.mxu0 0
  %1700 = vmatpush2.bf16.msra.mxu0 0
  %1701 = vmatprep.subr.bf16.mxu0 0
  %1702 = vmatpush2.bf16.msra.mxu0 0
  %1703 = vmatprep.subr.bf16.mxu0 0
  %1704 = vmatpush2.bf16.msra.mxu0 0
  %1705 = vmatprep.subr.bf16.mxu0 0
  %1706 = vmatpush2.bf16.msra.mxu0 0
  %1707 = vmatprep.subr.bf16.mxu0 0
  %1708 = vmatpush2.bf16.msra.mxu0 0
  %1709 = vmatprep.subr.bf16.mxu0 0
  %1710 = vmatpush2.bf16.msra.mxu0 0
  %1711 = vmatprep.subr.bf16.mxu0 0
  %1712 = vmatpush2.bf16.msra.mxu0 0
  %1713 = vmatprep.subr.bf16.mxu0 0
  %1714 = vmatpush2.bf16.msra.mxu0 0
  %1715 = vmatprep.mubr.bf16.mxu0 0
  %1716 = vmatmul.mubr.bf16.gmra.mxu0 %v1675
  %v1717 = vpop.f32.mrf.mxu0
  %v1718 = vadd.f32 0.0, %v1717
  %v1719 = vpop.f32.mrf.mxu0
  %v1720 = vpop.f32.mrf.mxu0
  %v1721 = vadd.f32 0.0, %v1720
  %v1722 = vpop.f32.mrf.mxu0
  %1723 = vmatprep.mubr.bf16.mxu0 0
  %1724 = vmatmul.mubr.bf16.gmra.mxu0 %v1678
  %v1725 = vpop.f32.mrf.mxu0
  %v1726 = vadd.f32 0.0, %v1725
  %v1727 = vpop.f32.mrf.mxu0
  %v1728 = vpop.f32.mrf.mxu0
  %v1729 = vadd.f32 0.0, %v1728
  %v1730 = vpop.f32.mrf.mxu0
  %1731 = vmatprep.mubr.bf16.mxu0 0
  %1732 = vmatmul.mubr.bf16.gmra.mxu0 %v1681
  %v1733 = vpop.f32.mrf.mxu0
  %v1734 = vadd.f32 0.0, %v1733
  %v1735 = vpop.f32.mrf.mxu0
  %v1736 = vpop.f32.mrf.mxu0
  %v1737 = vpop.f32.mrf.mxu0
  %1738 = vdwg.mxu0
  %v1739 = vadd.f32 %v123, %v1718
  %v1740 = vadd.f32 %v126, %v1721
  %v1741 = vadd.f32 %v131, %v1726
  %v1742 = vadd.f32 %v134, %v1729
  %v1743 = vadd.f32 %v139, %v1734
  %v1744 = vlaneseq
  %v1745 = vshrl.u32 %v1744, 7
  %v1746 = vsub.s32 0, %v1745
  %v1747 = vrot.slane %v31, %v1746
  %v1748 = vadd.f32 %v1739, %v1747
  %v1749 = vadd.f32 %v1740, %v1747
  %v1750 = vadd.f32 %v1741, %v1747
  %v1751 = vadd.f32 %v1742, %v1747
  %v1752 = vadd.f32 %v1743, %v1747
  %v1753 = vsel %vm149, %v1748, 0.0
  %1754 = vadd.xlane.f32.xlu0 %v1753
  %v1755 = vpop.xlane.xlu0 %1754
  %v1756 = vsel %vm149, %v1749, 0.0
  %1757 = vadd.xlane.f32.xlu0 %v1756
  %v1758 = vpop.xlane.xlu0 %1757
  %v1759 = vsel %vm149, %v1750, 0.0
  %1760 = vadd.xlane.f32.xlu0 %v1759
  %v1761 = vpop.xlane.xlu0 %1760
  %v1762 = vsel %vm149, %v1751, 0.0
  %1763 = vadd.xlane.f32.xlu0 %v1762
  %v1764 = vpop.xlane.xlu0 %1763
  %vm1765 = vcmask 254976
  %v1766 = vsel %vm1765, %v1752, 0.0
  %1767 = vadd.xlane.f32.xlu0 %v1766
  %v1768 = vpop.xlane.xlu0 %1767
  %v1769 = vrcp.pop 32.0
  %v1770 = vmul.f32 %v1755, %v1769
  %v1771 = vmul.f32 %v1758, %v1769
  %v1772 = vmul.f32 %v1761, %v1769
  %v1773 = vmul.f32 %v1764, %v1769
  %v1774 = vmul.f32 %v1768, %v1769
  %v1775 = vsub.f32 %v1748, %v1770
  %v1776 = vsub.f32 %v1749, %v1771
  %v1777 = vsub.f32 %v1750, %v1772
  %v1778 = vsub.f32 %v1751, %v1773
  %v1779 = vsub.f32 %v1752, %v1774
  %v1780 = vmul.f32 %v1775, %v1775
  %v1781 = vmul.f32 %v1776, %v1776
  %v1782 = vmul.f32 %v1777, %v1777
  %v1783 = vmul.f32 %v1778, %v1778
  %v1784 = vmul.f32 %v1779, %v1779
  %v1785 = vsel %vm149, %v1780, 0.0
  %1786 = vadd.xlane.f32.xlu0 %v1785
  %v1787 = vpop.xlane.xlu0 %1786
  %v1788 = vsel %vm149, %v1781, 0.0
  %1789 = vadd.xlane.f32.xlu0 %v1788
  %v1790 = vpop.xlane.xlu0 %1789
  %v1791 = vsel %vm149, %v1782, 0.0
  %1792 = vadd.xlane.f32.xlu0 %v1791
  %v1793 = vpop.xlane.xlu0 %1792
  %v1794 = vsel %vm149, %v1783, 0.0
  %1795 = vadd.xlane.f32.xlu0 %v1794
  %v1796 = vpop.xlane.xlu0 %1795
  %v1797 = vsel %vm1765, %v1784, 0.0
  %1798 = vadd.xlane.f32.xlu0 %v1797
  %v1799 = vpop.xlane.xlu0 %1798
  %v1800 = vmul.f32 %v1787, %v1769
  %v1801 = vmul.f32 %v1790, %v1769
  %v1802 = vmul.f32 %v1793, %v1769
  %v1803 = vmul.f32 %v1796, %v1769
  %v1804 = vmul.f32 %v1799, %v1769
  %v1805 = vadd.f32 %v1800, 1e-05
  %v1806 = vadd.f32 %v1801, 1e-05
  %v1807 = vadd.f32 %v1802, 1e-05
  %v1808 = vadd.f32 %v1803, 1e-05
  %v1809 = vadd.f32 %v1804, 1e-05
  %v1810 = vrsqrt.pop %v1805
  %v1811 = vrsqrt.pop %v1806
  %v1812 = vrsqrt.pop %v1807
  %v1813 = vrsqrt.pop %v1808
  %v1814 = vrsqrt.pop %v1809
  %v1815 = vmul.f32 %v1775, %v1810
  %v1816 = vmul.f32 %v1776, %v1811
  %v1817 = vmul.f32 %v1777, %v1812
  %v1818 = vmul.f32 %v1778, %v1813
  %v1819 = vmul.f32 %v1779, %v1814
  %v1820 = vlaneseq
  %v1821 = vshrl.u32 %v1820, 7
  %v1822 = vsub.s32 0, %v1821
  %v1823 = vrot.slane %v32, %v1822
  %v1824 = vmul.f32 %v1815, %v1823
  %v1825 = vmul.f32 %v1816, %v1823
  %v1826 = vmul.f32 %v1817, %v1823
  %v1827 = vmul.f32 %v1818, %v1823
  %v1828 = vmul.f32 %v1819, %v1823
  %v1829 = vlaneseq
  %v1830 = vshrl.u32 %v1829, 7
  %v1831 = vsub.s32 0, %v1830
  %v1832 = vrot.slane %v33, %v1831
  %v1833 = vadd.f32 %v1824, %v1832
  %v1834 = vadd.f32 %v1825, %v1832
  %v1835 = vadd.f32 %v1826, %v1832
  %v1836 = vadd.f32 %v1827, %v1832
  %v1837 = vadd.f32 %v1828, %v1832
  %v1838 = vpack.c.bf16 %v1834, %v1833
  %v1839 = vpack.c.bf16 %v1836, %v1835
  %v1840 = vpack.c.bf16 %v1837, %v1837
  %v1841 = vpack.c.bf16 %v43, %v42
  %v1842 = vpack.c.bf16 %v45, %v44
  %v1844 = vsel %vm149, %v1838, 0
  %v1847 = vsel %vm149, %v1839, 0
  %v1850 = vsel %vm149, %v1840, 0
  %1852 = vmatprep.subr.bf16.mxu0 0
  %1853 = vmatpush1.bf16.msra.mxu0 0
  %1854 = vmatprep.subr.bf16.mxu0 0
  %1855 = vmatpush1.bf16.msra.mxu0 0
  %1856 = vmatprep.subr.bf16.mxu0 0
  %1857 = vmatpush1.bf16.msra.mxu0 0
  %1858 = vmatprep.subr.bf16.mxu0 0
  %1859 = vmatpush1.bf16.msra.mxu0 0
  %1860 = vmatprep.subr.bf16.mxu0 0
  %1861 = vmatpush1.bf16.msra.mxu0 0
  %1862 = vmatprep.subr.bf16.mxu0 0
  %1863 = vmatpush1.bf16.msra.mxu0 0
  %1864 = vmatprep.subr.bf16.mxu0 0
  %1865 = vmatpush1.bf16.msra.mxu0 %v1842
  %1866 = vmatprep.subr.bf16.mxu0 0
  %1867 = vmatpush1.bf16.msra.mxu0 %v1841
  %1868 = vmatprep.subr.bf16.mxu0 0
  %1869 = vmatpush2.bf16.msra.mxu0 0
  %1870 = vmatprep.subr.bf16.mxu0 0
  %1871 = vmatpush2.bf16.msra.mxu0 0
  %1872 = vmatprep.subr.bf16.mxu0 0
  %1873 = vmatpush2.bf16.msra.mxu0 0
  %1874 = vmatprep.subr.bf16.mxu0 0
  %1875 = vmatpush2.bf16.msra.mxu0 0
  %1876 = vmatprep.subr.bf16.mxu0 0
  %1877 = vmatpush2.bf16.msra.mxu0 0
  %1878 = vmatprep.subr.bf16.mxu0 0
  %1879 = vmatpush2.bf16.msra.mxu0 0
  %1880 = vmatprep.subr.bf16.mxu0 0
  %1881 = vmatpush2.bf16.msra.mxu0 0
  %1882 = vmatprep.subr.bf16.mxu0 0
  %1883 = vmatpush2.bf16.msra.mxu0 0
  %1884 = vmatprep.mubr.bf16.mxu0 0
  %1885 = vmatmul.mubr.bf16.gmra.mxu0 %v1844
  %v1886 = vpop.f32.mrf.mxu0
  %v1887 = vadd.f32 %v46, %v1886
  %v1888 = vpop.f32.mrf.mxu0
  %v1889 = vpop.f32.mrf.mxu0
  %v1890 = vadd.f32 %v46, %v1889
  %v1891 = vpop.f32.mrf.mxu0
  %1892 = vmatprep.mubr.bf16.mxu0 0
  %1893 = vmatmul.mubr.bf16.gmra.mxu0 %v1847
  %v1894 = vpop.f32.mrf.mxu0
  %v1895 = vadd.f32 %v46, %v1894
  %v1896 = vpop.f32.mrf.mxu0
  %v1897 = vpop.f32.mrf.mxu0
  %v1898 = vadd.f32 %v46, %v1897
  %v1899 = vpop.f32.mrf.mxu0
  %1900 = vmatprep.mubr.bf16.mxu0 0
  %1901 = vmatmul.mubr.bf16.gmra.mxu0 %v1850
  %v1902 = vpop.f32.mrf.mxu0
  %v1903 = vadd.f32 %v46, %v1902
  %v1904 = vpop.f32.mrf.mxu0
  %v1905 = vpop.f32.mrf.mxu0
  %v1906 = vpop.f32.mrf.mxu0
  %1907 = vdwg.mxu0
  %v1908 = vmul.f32 %v1887, %v1887
  %v1909 = vmul.f32 %v1890, %v1890
  %v1910 = vmul.f32 %v1895, %v1895
  %v1911 = vmul.f32 %v1898, %v1898
  %v1912 = vmul.f32 %v1903, %v1903
  %v1913 = vmul.f32 %v1887, %v1908
  %v1914 = vmul.f32 %v1890, %v1909
  %v1915 = vmul.f32 %v1895, %v1910
  %v1916 = vmul.f32 %v1898, %v1911
  %v1917 = vmul.f32 %v1903, %v1912
  %v1918 = vmul.f32 %v1913, 0.044715
  %v1919 = vmul.f32 %v1914, 0.044715
  %v1920 = vmul.f32 %v1915, 0.044715
  %v1921 = vmul.f32 %v1916, 0.044715
  %v1922 = vmul.f32 %v1917, 0.044715
  %v1923 = vadd.f32 %v1887, %v1918
  %v1924 = vadd.f32 %v1890, %v1919
  %v1925 = vadd.f32 %v1895, %v1920
  %v1926 = vadd.f32 %v1898, %v1921
  %v1927 = vadd.f32 %v1903, %v1922
  %v1928 = vmul.f32 %v1923, 0.7978846
  %v1929 = vmul.f32 %v1924, 0.7978846
  %v1930 = vmul.f32 %v1925, 0.7978846
  %v1931 = vmul.f32 %v1926, 0.7978846
  %v1932 = vmul.f32 %v1927, 0.7978846
  %v1933 = vtanh.pop %v1928
  %v1934 = vtanh.pop %v1929
  %v1935 = vtanh.pop %v1930
  %v1936 = vtanh.pop %v1931
  %v1937 = vtanh.pop %v1932
  %v1938 = vadd.f32 %v1933, 1.0
  %v1939 = vadd.f32 %v1934, 1.0
  %v1940 = vadd.f32 %v1935, 1.0
  %v1941 = vadd.f32 %v1936, 1.0
  %v1942 = vadd.f32 %v1937, 1.0
  %v1943 = vmul.f32 %v1938, 0.5
  %v1944 = vmul.f32 %v1939, 0.5
  %v1945 = vmul.f32 %v1940, 0.5
  %v1946 = vmul.f32 %v1941, 0.5
  %v1947 = vmul.f32 %v1942, 0.5
  %v1948 = vmul.f32 %v1887, %v1943
  %v1949 = vmul.f32 %v1890, %v1944
  %v1950 = vmul.f32 %v1895, %v1945
  %v1951 = vmul.f32 %v1898, %v1946
  %v1952 = vmul.f32 %v1903, %v1947
  %v1953 = vpack.c.bf16 %v1949, %v1948
  %v1954 = vpack.c.bf16 %v1951, %v1950
  %v1955 = vpack.c.bf16 %v1952, %v1952
  %v1956 = vpack.c.bf16 %v24, %v23
  %v1957 = vpack.c.bf16 %v26, %v25
  %v1958 = vpack.c.bf16 %v28, %v27
  %v1959 = vpack.c.bf16 %v30, %v29
  %vm1960 = vcmask 523264
  %v1962 = vsel %vm1960, %v1953, 0
  %v1965 = vsel %vm1960, %v1954, 0
  %v1968 = vsel %vm1960, %v1955, 0
  %1970 = vmatprep.subr.bf16.mxu0 0
  %1971 = vmatpush1.bf16.msra.mxu0 0
  %1972 = vmatprep.subr.bf16.mxu0 0
  %1973 = vmatpush1.bf16.msra.mxu0 0
  %1974 = vmatprep.subr.bf16.mxu0 0
  %1975 = vmatpush1.bf16.msra.mxu0 0
  %1976 = vmatprep.subr.bf16.mxu0 0
  %1977 = vmatpush1.bf16.msra.mxu0 0
  %1978 = vmatprep.subr.bf16.mxu0 0
  %1979 = vmatpush1.bf16.msra.mxu0 %v1959
  %1980 = vmatprep.subr.bf16.mxu0 0
  %1981 = vmatpush1.bf16.msra.mxu0 %v1958
  %1982 = vmatprep.subr.bf16.mxu0 0
  %1983 = vmatpush1.bf16.msra.mxu0 %v1957
  %1984 = vmatprep.subr.bf16.mxu0 0
  %1985 = vmatpush1.bf16.msra.mxu0 %v1956
  %1986 = vmatprep.subr.bf16.mxu0 0
  %1987 = vmatpush2.bf16.msra.mxu0 0
  %1988 = vmatprep.subr.bf16.mxu0 0
  %1989 = vmatpush2.bf16.msra.mxu0 0
  %1990 = vmatprep.subr.bf16.mxu0 0
  %1991 = vmatpush2.bf16.msra.mxu0 0
  %1992 = vmatprep.subr.bf16.mxu0 0
  %1993 = vmatpush2.bf16.msra.mxu0 0
  %1994 = vmatprep.subr.bf16.mxu0 0
  %1995 = vmatpush2.bf16.msra.mxu0 0
  %1996 = vmatprep.subr.bf16.mxu0 0
  %1997 = vmatpush2.bf16.msra.mxu0 0
  %1998 = vmatprep.subr.bf16.mxu0 0
  %1999 = vmatpush2.bf16.msra.mxu0 0
  %2000 = vmatprep.subr.bf16.mxu0 0
  %2001 = vmatpush2.bf16.msra.mxu0 0
  %2002 = vmatprep.mubr.bf16.mxu0 0
  %2003 = vmatmul.mubr.bf16.gmra.mxu0 %v1962
  %v2004 = vpop.f32.mrf.mxu0
  %v2005 = vpop.f32.mrf.mxu0
  %v2006 = vpop.f32.mrf.mxu0
  %v2007 = vpop.f32.mrf.mxu0
  %2008 = vmatprep.mubr.bf16.mxu0 0
  %2009 = vmatmul.mubr.bf16.gmra.mxu0 %v1965
  %v2010 = vpop.f32.mrf.mxu0
  %v2011 = vadd.f32 0.0, %v2010
  %v2012 = vpop.f32.mrf.mxu0
  %v2013 = vpop.f32.mrf.mxu0
  %v2014 = vpop.f32.mrf.mxu0
  %2015 = vmatprep.mubr.bf16.mxu0 0
  %2016 = vmatmul.mubr.bf16.gmra.mxu0 %v1968
  %v2017 = vpop.f32.mrf.mxu0
  %v2018 = vadd.f32 0.0, %v2017
  %v2019 = vpop.f32.mrf.mxu0
  %v2020 = vpop.f32.mrf.mxu0
  %v2021 = vpop.f32.mrf.mxu0
  %2022 = vdwg.mxu0
  %v2023 = vadd.f32 %v1835, %v2011
  %v2024 = vadd.f32 %v1837, %v2018
  %v2025 = vlaneseq
  %v2026 = vshrl.u32 %v2025, 7
  %v2027 = vsub.s32 0, %v2026
  %v2028 = vrot.slane %v34, %v2027
  %v2029 = vadd.f32 %v2023, %v2028
  %v2030 = vadd.f32 %v2024, %v2028
  %v2031 = vsel %vm149, %v2029, 0.0
  %2032 = vadd.xlane.f32.xlu0 %v2031
  %v2033 = vpop.xlane.xlu0 %2032
  %v2034 = vsel %vm1765, %v2030, 0.0
  %2035 = vadd.xlane.f32.xlu0 %v2034
  %v2036 = vpop.xlane.xlu0 %2035
  %v2037 = vmul.f32 %v2033, %v1769
  %v2038 = vmul.f32 %v2036, %v1769
  %v2039 = vsub.f32 %v2029, %v2037
  %v2040 = vsub.f32 %v2030, %v2038
  %v2041 = vmul.f32 %v2039, %v2039
  %v2042 = vmul.f32 %v2040, %v2040
  %v2043 = vsel %vm149, %v2041, 0.0
  %2044 = vadd.xlane.f32.xlu0 %v2043
  %v2045 = vpop.xlane.xlu0 %2044
  %v2046 = vsel %vm1765, %v2042, 0.0
  %2047 = vadd.xlane.f32.xlu0 %v2046
  %v2048 = vpop.xlane.xlu0 %2047
  %v2049 = vmul.f32 %v2045, %v1769
  %v2050 = vmul.f32 %v2048, %v1769
  %v2051 = vadd.f32 %v2049, 1e-05
  %v2052 = vadd.f32 %v2050, 1e-05
  %v2053 = vrsqrt.pop %v2051
  %v2054 = vrsqrt.pop %v2052
  %v2055 = vmul.f32 %v2039, %v2053
  %v2056 = vmul.f32 %v2040, %v2054
  %v2057 = vlaneseq
  %v2058 = vshrl.u32 %v2057, 7
  %v2059 = vsub.s32 0, %v2058
  %v2060 = vrot.slane %v35, %v2059
  %v2061 = vmul.f32 %v2055, %v2060
  %v2062 = vmul.f32 %v2056, %v2060
  %v2063 = vlaneseq
  %v2064 = vshrl.u32 %v2063, 7
  %v2065 = vsub.s32 0, %v2064
  %v2066 = vrot.slane %v36, %v2065
  %v2067 = vadd.f32 %v2061, %v2066
  %v2068 = vadd.f32 %v2062, %v2066
  %v2069 = vsel %vm64, %v2067, %v2068
  %v2070 = vsel %vm84, %v2069, 0.0
  %v2071 = vpack.c.bf16 %v2070, %v2070
  %v2072 = vpack.c.bf16 %v48, %v47
  %v2073 = vpack.c.bf16 %v50, %v49
  %v2075 = vsel %vm149, %v2071, 0
  %2077 = vmatprep.subr.bf16.mxu0 0
  %2078 = vmatpush1.bf16.msra.mxu0 0
  %2079 = vmatprep.subr.bf16.mxu0 0
  %2080 = vmatpush1.bf16.msra.mxu0 0
  %2081 = vmatprep.subr.bf16.mxu0 0
  %2082 = vmatpush1.bf16.msra.mxu0 0
  %2083 = vmatprep.subr.bf16.mxu0 0
  %2084 = vmatpush1.bf16.msra.mxu0 0
  %2085 = vmatprep.subr.bf16.mxu0 0
  %2086 = vmatpush1.bf16.msra.mxu0 0
  %2087 = vmatprep.subr.bf16.mxu0 0
  %2088 = vmatpush1.bf16.msra.mxu0 0
  %2089 = vmatprep.subr.bf16.mxu0 0
  %2090 = vmatpush1.bf16.msra.mxu0 %v2073
  %2091 = vmatprep.subr.bf16.mxu0 0
  %2092 = vmatpush1.bf16.msra.mxu0 %v2072
  %2093 = vmatprep.subr.bf16.mxu0 0
  %2094 = vmatpush2.bf16.msra.mxu0 0
  %2095 = vmatprep.subr.bf16.mxu0 0
  %2096 = vmatpush2.bf16.msra.mxu0 0
  %2097 = vmatprep.subr.bf16.mxu0 0
  %2098 = vmatpush2.bf16.msra.mxu0 0
  %2099 = vmatprep.subr.bf16.mxu0 0
  %2100 = vmatpush2.bf16.msra.mxu0 0
  %2101 = vmatprep.subr.bf16.mxu0 0
  %2102 = vmatpush2.bf16.msra.mxu0 0
  %2103 = vmatprep.subr.bf16.mxu0 0
  %2104 = vmatpush2.bf16.msra.mxu0 0
  %2105 = vmatprep.subr.bf16.mxu0 0
  %2106 = vmatpush2.bf16.msra.mxu0 0
  %2107 = vmatprep.subr.bf16.mxu0 0
  %2108 = vmatpush2.bf16.msra.mxu0 0
  %2109 = vmatprep.mubr.bf16.mxu0 0
  %2110 = vmatmul.mubr.bf16.gmra.mxu0 %v2075
  %v2111 = vpop.f32.mrf.mxu0
  %v2112 = vadd.f32 %v51, %v2111
  %v2113 = vpop.f32.mrf.mxu0
  %v2114 = vpop.f32.mrf.mxu0
  %v2115 = vpop.f32.mrf.mxu0
  %2116 = vdwg.mxu0
  %2117 = vst [vmem:[%s3] sm:$0xff] %v2112
  // Predicated region
  $region14: #{cross_ts_forward.1} parent=0 // pred_check
    _
  $region15: #{cross_ts_forward.1} parent=0 // pred_check_branch
    %2119 = sbr.rel (0) target = $region17
  $region16: #{cross_ts_forward.1} parent=0 // pred_region
    _
  $region17: #{cross_ts_forward.1} parent=0 // pred_fallthru
    _
  // Predicated region
  $region18: #{cross_ts_forward.1} parent=0 // pred_check
    _
  $region19: #{cross_ts_forward.1} parent=0 // pred_check_branch
    %2121 = sbr.rel (0) target = $region21
  $region20: #{cross_ts_forward.1} parent=0 // pred_region
    _
  $region21: #{cross_ts_forward.1} parent=0 // pred_fallthru
    _

</llo_original>
